<compile_context>
chip_gen: v5e
topology: v5e:2x2
jax: 0.10.0
libtpu: 0.0.40
codegen_flags: <defaults>
</compile_context>

<pallas_src>
import jax
import jax.numpy as jnp
from jax.experimental import pallas as pl
from jax.experimental.pallas import tpu as pltpu


def autoencoder_kernel(x_ref, w1_ref, b1_ref, w2_ref, b2_ref, enc_ref, dec_ref):
    # ---- encoder: Linear(in_dim -> hidden) + ReLU ----
    # x arrives f32 from HBM; cast to the MXU dtype in VMEM (VPU, hidden under
    # the matmul), accumulate in f32 on the MXU.
    x = x_ref[...].astype(w1_ref.dtype)
    h = jnp.dot(x, w1_ref[...], preferred_element_type=jnp.float32)
    h = jnp.maximum(h + b1_ref[...], 0.0)                 # bias + ReLU in f32 (VPU)

    # True-width encoder writeback (hidden columns only; padded lanes beyond
    # `hidden` are exactly zero: padded w1 cols / b1 cols are 0 -> ReLU(0)=0).
    hidden = enc_ref.shape[1]
    enc_ref[...] = h[:, :hidden].astype(enc_ref.dtype)

    # ---- decoder: Linear(hidden -> out_dim) + Sigmoid ----
    # Padded w2 rows are 0, so the padded part of h contributes nothing.
    z = jnp.dot(h.astype(w2_ref.dtype), w2_ref[...],
                preferred_element_type=jnp.float32)
    z = z + b2_ref[...]
    # sigmoid(z) = 1 / (1 + exp(-z)); exp and reciprocal both issue on the EUP
    # slot, keeping the decoder epilogue off the VALU.
    dec_ref[...] = pl.reciprocal(1.0 + jnp.exp(-z), approx=True).astype(dec_ref.dtype)


def prepare_params(w1, b1, w2, b2, mxu_dtype=jnp.bfloat16):
    """Pad hidden dim to a lane-dense multiple of 128 and cast ONCE.

    Call this once (outside the training/inference step) and reuse the result;
    per-call pads/casts each cost an extra XLA launch + HBM pass comparable to
    the whole kernel's runtime.

    w1: [in_dim, hidden]   b1: [1, hidden]
    w2: [hidden, out_dim]  b2: [1, out_dim]
    Exactness is preserved: padded b1/w1 columns are 0 -> ReLU(0) = 0, and the
    corresponding padded w2 rows are 0.
    """
    hidden = w1.shape[1]
    h_pad = max(128, pl.cdiv(hidden, 128) * 128)
    if h_pad != hidden:
        w1 = jnp.pad(w1, ((0, 0), (0, h_pad - hidden)))
        b1 = jnp.pad(b1, ((0, 0), (0, h_pad - hidden)))
        w2 = jnp.pad(w2, ((0, h_pad - hidden), (0, 0)))
    return (w1.astype(mxu_dtype), b1.astype(jnp.float32),
            w2.astype(mxu_dtype), b2.astype(jnp.float32))


def _choose_tm(B, tm_cap=512):
    """Pick the batch-row tile.

    Single grid step on single-TC chips (v5e/v6e: extra steps are pure ~0.35us
    overhead at this size); >=2 'parallel' steps on v7x so both TensorCores get
    work. Tiles are 16-row aligned (bf16 packs 16 rows per sublane group) and
    capped so large batches stay well inside every generation's VMEM budget.
    """
    try:
        multi_tc = "v7" in jax.devices()[0].device_kind.lower()
    except Exception:  # pragma: no cover - device query is best-effort
        multi_tc = False
    steps = 2 if (multi_tc and B >= 32) else 1
    steps = max(steps, pl.cdiv(B, tm_cap))
    tm = pl.cdiv(B, steps)
    if steps > 1:
        tm = pl.cdiv(tm, 16) * 16
    return tm


def autoencoder_forward(x, w1, b1, w2, b2, *, hidden, tm=None, out_dtype=None):
    """Fused encoder+decoder forward.

    x:  [B, in_dim] (f32; cast to bf16 inside the kernel)
    w1/b1/w2/b2: outputs of prepare_params() (hidden already padded to 128).
    hidden: true (unpadded) hidden width (static).
    Returns (encoder_out [B, hidden], decoder_out [B, out_dim]).
    out_dtype: defaults to x.dtype; pass jnp.bfloat16 to halve writeback HBM
    traffic if downstream consumers accept bf16.
    """
    B, in_dim = x.shape
    h_pad = w1.shape[1]
    out_dim = w2.shape[1]
    if out_dtype is None:
        out_dtype = x.dtype

    if tm is None:
        tm = _choose_tm(B)
    b_pad = pl.cdiv(B, tm) * tm
    if b_pad != B:
        x = jnp.pad(x, ((0, b_pad - B), (0, 0)))

    grid = (b_pad // tm,)
    const = lambda i: (0, 0)
    batch = lambda i: (i, 0)
    # Constant block index -> fetched once, VMEM-resident; single-buffered
    # (no dead second buffer / extra prologue DMA).
    resident = lambda shape: pl.BlockSpec(shape, const, pipeline_mode=pl.Buffered(1))

    enc_full, dec_full = pl.pallas_call(
        autoencoder_kernel,
        out_shape=(
            jax.ShapeDtypeStruct((b_pad, hidden), out_dtype),
            jax.ShapeDtypeStruct((b_pad, out_dim), out_dtype),
        ),
        grid=grid,
        in_specs=[
            pl.BlockSpec((tm, in_dim), batch),     # x streams (f32 -> bf16 in kernel)
            resident((in_dim, h_pad)),             # w1
            resident((1, h_pad)),                  # b1
            resident((h_pad, out_dim)),            # w2
            resident((1, out_dim)),                # b2
        ],
        out_specs=(
            pl.BlockSpec((tm, hidden), batch),     # encoder_out (true width)
            pl.BlockSpec((tm, out_dim), batch),    # decoder_out
        ),
        compiler_params=pltpu.CompilerParams(
            dimension_semantics=("parallel",),
        ),
    )(x, w1, b1, w2, b2)

    if b_pad != B:
        enc_full, dec_full = enc_full[:B], dec_full[:B]
    return enc_full, dec_full


def init_params(key, in_dim, hidden, out_dim, dtype=jnp.float32):
    """PyTorch-style Linear init: U(-1/sqrt(fan_in), 1/sqrt(fan_in))."""
    k1, k2, k3, k4 = jax.random.split(key, 4)
    bound1 = 1.0 / (in_dim ** 0.5)
    bound2 = 1.0 / (hidden ** 0.5)
    w1 = jax.random.uniform(k1, (in_dim, hidden), dtype, -bound1, bound1)
    b1 = jax.random.uniform(k2, (1, hidden), dtype, -bound1, bound1)
    w2 = jax.random.uniform(k3, (hidden, out_dim), dtype, -bound2, bound2)
    b2 = jax.random.uniform(k4, (1, out_dim), dtype, -bound2, bound2)
    return w1, b1, w2, b2


if __name__ == "__main__":
    # Module shapes: in_dim=784, hidden=30, out_dim=784; small batch for the test.
    B, IN_DIM, HIDDEN, OUT_DIM = 64, 784, 30, 784

    key = jax.random.PRNGKey(0)
    kx, kp = jax.random.split(key)
    x = jax.random.uniform(kx, (B, IN_DIM), jnp.float32)   # MNIST-like pixels in [0,1)
    w1, b1, w2, b2 = init_params(kp, IN_DIM, HIDDEN, OUT_DIM)

    # Pad + cast the parameters exactly once (amortized across forward calls).
    params = prepare_params(w1, b1, w2, b2)

    fwd = jax.jit(autoencoder_forward, static_argnames=("hidden", "tm", "out_dtype"))
    enc_out, dec_out = fwd(x, *params, hidden=HIDDEN)
    jax.block_until_ready((enc_out, dec_out))

    # Precision-matched pure-JAX reference (bf16 MXU inputs, f32 accumulation,
    # f32 elementwise) -- same numerics policy as the kernel.
    ref_enc = jnp.maximum(
        jnp.dot(x.astype(jnp.bfloat16), w1.astype(jnp.bfloat16),
                preferred_element_type=jnp.float32) + b1, 0.0)
    ref_dec = jax.nn.sigmoid(
        jnp.dot(ref_enc.astype(jnp.bfloat16), w2.astype(jnp.bfloat16),
                preferred_element_type=jnp.float32) + b2)

    assert enc_out.shape == (B, HIDDEN) and dec_out.shape == (B, OUT_DIM)
    assert jnp.allclose(enc_out, ref_enc, atol=5e-3, rtol=5e-3), \
        float(jnp.max(jnp.abs(enc_out - ref_enc)))
    assert jnp.allclose(dec_out, ref_dec, atol=5e-3, rtol=5e-3), \
        float(jnp.max(jnp.abs(dec_out - ref_dec)))

    print("KERNEL_OK")
</pallas_src>

<mosaic_0001>
module attributes {stable_mosaic.version = 11 : i64} {
  func.func @autoencoder_kernel(%arg0: i32, %arg1: memref<64x784xf32, #tpu.memory_space<vmem>>, %arg2: memref<784x128xbf16, #tpu.memory_space<vmem>>, %arg3: memref<1x128xf32, #tpu.memory_space<vmem>>, %arg4: memref<128x784xbf16, #tpu.memory_space<vmem>>, %arg5: memref<1x784xf32, #tpu.memory_space<vmem>>, %arg6: memref<64x30xf32, #tpu.memory_space<vmem>>, %arg7: memref<64x784xf32, #tpu.memory_space<vmem>>) attributes {dimension_semantics = [#tpu.dimension_semantics<parallel>], iteration_bounds = array<i64: 1>, scalar_prefetch = 0 : i64, scratch_operands = 0 : i64, tpu.core_type = #tpu.core_type<tc>, window_params = [{transform_indices = @transform_0, window_bounds = array<i64: 64, 784>}, {pipeline_mode = #tpu.pipeline_mode<synchronous>, transform_indices = @transform_1, window_bounds = array<i64: 784, 128>}, {pipeline_mode = #tpu.pipeline_mode<synchronous>, transform_indices = @transform_2, window_bounds = array<i64: 1, 128>}, {pipeline_mode = #tpu.pipeline_mode<synchronous>, transform_indices = @transform_3, window_bounds = array<i64: 128, 784>}, {pipeline_mode = #tpu.pipeline_mode<synchronous>, transform_indices = @transform_4, window_bounds = array<i64: 1, 784>}, {transform_indices = @transform_5, window_bounds = array<i64: 64, 30>}, {transform_indices = @transform_6, window_bounds = array<i64: 64, 784>}]} {
    %c0 = arith.constant 0 : index
    %c0_0 = arith.constant 0 : index
    %0 = vector.load %arg1[%c0, %c0_0] : memref<64x784xf32, #tpu.memory_space<vmem>>, vector<64x784xf32>
    %1 = arith.truncf %0 : vector<64x784xf32> to vector<64x784xbf16>
    %c0_1 = arith.constant 0 : index
    %c0_2 = arith.constant 0 : index
    %2 = vector.load %arg2[%c0_1, %c0_2] : memref<784x128xbf16, #tpu.memory_space<vmem>>, vector<784x128xbf16>
    %cst = arith.constant dense<0.000000e+00> : vector<64x128xf32>
    %3 = tpu.matmul %1, %2, %cst {dimension_numbers = #tpu.dot_dimension_numbers<[1], [0], [0], [1], [0, 0, 1, 1], [], []>} : vector<64x784xbf16>, vector<784x128xbf16>, vector<64x128xf32> -> vector<64x128xf32>
    %c0_3 = arith.constant 0 : index
    %c0_4 = arith.constant 0 : index
    %4 = vector.load %arg3[%c0_3, %c0_4] : memref<1x128xf32, #tpu.memory_space<vmem>>, vector<1x128xf32>
    %5 = vector.broadcast %4 : vector<1x128xf32> to vector<64x128xf32>
    %6 = arith.addf %3, %5 : vector<64x128xf32>
    %cst_5 = arith.constant 0.000000e+00 : f32
    %7 = vector.broadcast %cst_5 : f32 to vector<64x128xf32>
    %8 = arith.maximumf %6, %7 : vector<64x128xf32>
    %9 = vector.extract_strided_slice %8 {offsets = [0, 0], sizes = [64, 30], strides = [1, 1]} : vector<64x128xf32> to vector<64x30xf32>
    %c0_6 = arith.constant 0 : index
    %c0_7 = arith.constant 0 : index
    %10 = vector.load %arg6[%c0_6, %c0_7] : memref<64x30xf32, #tpu.memory_space<vmem>>, vector<64x30xf32>
    tpu.vector_store %arg6[%c0_6, %c0_7], %9 {strides = array<i32>} : memref<64x30xf32, #tpu.memory_space<vmem>>, vector<64x30xf32>,
    %11 = arith.truncf %8 : vector<64x128xf32> to vector<64x128xbf16>
    %c0_8 = arith.constant 0 : index
    %c0_9 = arith.constant 0 : index
    %12 = vector.load %arg4[%c0_8, %c0_9] : memref<128x784xbf16, #tpu.memory_space<vmem>>, vector<128x784xbf16>
    %cst_10 = arith.constant dense<0.000000e+00> : vector<64x784xf32>
    %13 = tpu.matmul %11, %12, %cst_10 {dimension_numbers = #tpu.dot_dimension_numbers<[1], [0], [0], [1], [0, 0, 1, 1], [], []>} : vector<64x128xbf16>, vector<128x784xbf16>, vector<64x784xf32> -> vector<64x784xf32>
    %c0_11 = arith.constant 0 : index
    %c0_12 = arith.constant 0 : index
    %14 = vector.load %arg5[%c0_11, %c0_12] : memref<1x784xf32, #tpu.memory_space<vmem>>, vector<1x784xf32>
    %15 = vector.broadcast %14 : vector<1x784xf32> to vector<64x784xf32>
    %16 = arith.addf %13, %15 : vector<64x784xf32>
    %cst_13 = arith.constant 0.000000e+00 : f32
    %17 = vector.broadcast %cst_13 : f32 to vector<64x784xf32>
    %18 = arith.subf %17, %16 : vector<64x784xf32>
    %19 = math.exp %18 : vector<64x784xf32>
    %cst_14 = arith.constant 1.000000e+00 : f32
    %20 = vector.broadcast %cst_14 : f32 to vector<64x784xf32>
    %21 = arith.addf %20, %19 : vector<64x784xf32>
    %22 = tpu.reciprocal %21 {approx = true} : vector<64x784xf32> -> vector<64x784xf32>
    %c0_15 = arith.constant 0 : index
    %c0_16 = arith.constant 0 : index
    %23 = vector.load %arg7[%c0_15, %c0_16] : memref<64x784xf32, #tpu.memory_space<vmem>>, vector<64x784xf32>
    tpu.vector_store %arg7[%c0_15, %c0_16], %22 {strides = array<i32>} : memref<64x784xf32, #tpu.memory_space<vmem>>, vector<64x784xf32>,
    return
  }
  func.func @transform_0(%arg0: i32) -> (i32, i32) {
    %c0_i32 = arith.constant 0 : i32
    %c0_i32_0 = arith.constant 0 : i32
    return %arg0, %c0_i32 : i32, i32
  }
  func.func @transform_1(%arg0: i32) -> (i32, i32) {
    %c0_i32 = arith.constant 0 : i32
    %c0_i32_0 = arith.constant 0 : i32
    %c0_i32_1 = arith.constant 0 : i32
    return %c0_i32, %c0_i32_0 : i32, i32
  }
  func.func @transform_2(%arg0: i32) -> (i32, i32) {
    %c0_i32 = arith.constant 0 : i32
    %c0_i32_0 = arith.constant 0 : i32
    %c0_i32_1 = arith.constant 0 : i32
    return %c0_i32, %c0_i32_0 : i32, i32
  }
  func.func @transform_3(%arg0: i32) -> (i32, i32) {
    %c0_i32 = arith.constant 0 : i32
    %c0_i32_0 = arith.constant 0 : i32
    %c0_i32_1 = arith.constant 0 : i32
    return %c0_i32, %c0_i32_0 : i32, i32
  }
  func.func @transform_4(%arg0: i32) -> (i32, i32) {
    %c0_i32 = arith.constant 0 : i32
    %c0_i32_0 = arith.constant 0 : i32
    %c0_i32_1 = arith.constant 0 : i32
    return %c0_i32, %c0_i32_0 : i32, i32
  }
  func.func @transform_5(%arg0: i32) -> (i32, i32) {
    %c0_i32 = arith.constant 0 : i32
    %c0_i32_0 = arith.constant 0 : i32
    return %arg0, %c0_i32 : i32, i32
  }
  func.func @transform_6(%arg0: i32) -> (i32, i32) {
    %c0_i32 = arith.constant 0 : i32
    %c0_i32_0 = arith.constant 0 : i32
    return %arg0, %c0_i32 : i32, i32
  }
}

</mosaic_0001>

<llo_original>
// kernel: autoencoder_forward.1
$region0: #{autoencoder_forward.1}
  #allocation0 [shape = 'u32[]', space=smem, size = 0x4, offset = 0x4, fixed_abs, tag = 'smem constant byte address 0x4 - core index']
  #allocation1 [shape = 'u32[72,128]{1,0:T(1,128)}', space=vmem, size = 0x9000, scoped, tag = 'internal scratch']
  %s0 = inlined_call_operand.vmem [shape: f32[64,784], index: 0, kind: input, shape index: {}]
  %s1 = inlined_call_operand.vmem [shape: bf16[784,128], index: 1, kind: input, shape index: {}]
  %s2 = inlined_call_operand.hbm [shape: f32[1,128], index: 2, kind: input, shape index: {}]
  %s3 = inlined_call_operand.vmem [shape: bf16[128,784], index: 3, kind: input, shape index: {}]
  %s4 = inlined_call_operand.hbm [shape: f32[1,784], index: 4, kind: input, shape index: {}]
  %s5 = inlined_call_operand.vmem [shape: f32[64,30], index: 5, kind: output, shape index: {0}]
  %s6 = inlined_call_operand.hbm [shape: f32[64,784], index: 6, kind: output, shape index: {1}]
  %7 = xla_tuple %s5, %s6
  %s8 = sld [smem:[#allocation0]]
  $region46: #{autoencoder_forward.1} parent=0
    _
  %s10 = ssub.s32 1, %s8
  %s11 = scalar_select 0, %s10, %s8
  $region1: #{autoencoder_forward.1} parent=0
    #allocation2 [shape = 'u8[512]{0}', space=vmem, size = 0x400, scoped, tag = 'input window, operand 2, single buffered']
    #allocation3 [shape = 's32[1]{0}', space=sflag, size = 0x4, scoped, tag = 'scoped memory for autoencoder_forward.1']
    #allocation4 [shape = 's32[1]{0}', space=sflag, size = 0x4, scoped, tag = 'scoped memory for autoencoder_forward.1']
    #allocation5 [shape = 'u8[3584]{0}', space=vmem, size = 0x1000, scoped, tag = 'input window, operand 4, single buffered']
    #allocation6 [shape = 's32[1]{0}', space=sflag, size = 0x4, scoped, tag = 'scoped memory for autoencoder_forward.1']
    #allocation7 [shape = 'u8[229376]{0}', space=vmem, size = 0x38000, scoped, tag = 'output window, operand 1, single buffered']
    %12 = vsyncpa [#allocation3], 0
    %13 = vsyncpa [#allocation6], 0
    %14 = vsyncpa [#allocation4], 0
    // Predicated region
    $region2: #{autoencoder_forward.1} parent=1 // pred_check
      _
    $region3: #{autoencoder_forward.1} parent=1 // pred_check_branch
      %16 = sbr.rel (0) target = $region5
    $region4: #{autoencoder_forward.1} parent=1 // pred_region
      _
    $region5: #{autoencoder_forward.1} parent=1 // pred_fallthru
      _
    // Predicated region
    $region6: #{autoencoder_forward.1} parent=1 // pred_check
      _
    $region7: #{autoencoder_forward.1} parent=1 // pred_check_branch
      %18 = sbr.rel (0) target = $region9
    $region8: #{autoencoder_forward.1} parent=1 // pred_region
      _
    $region9: #{autoencoder_forward.1} parent=1 // pred_fallthru
      _
    // Predicated region
    $region10: #{autoencoder_forward.1} parent=1 // pred_check
      _
    $region11: #{autoencoder_forward.1} parent=1 // pred_check_branch
      %20 = sbr.rel (0) target = $region13
    $region12: #{autoencoder_forward.1} parent=1 // pred_region
      %22 = vsyncadd [#allocation3], 0
      %s24 = sshll.u32 %s2, 4
      %s25 = int_to_ptr.hbm [resolvable:$true] %s24
      %s26 = sshll.u32 [#allocation2], 4
      %s27 = int_to_ptr.vmem [resolvable:$true] %s26
      %29 = dma.hbm_to_vmem [thread:$0]  %s25, 16, %s27, [#allocation3]
    $region13: #{autoencoder_forward.1} parent=1 // pred_fallthru
      _
    // Predicated region
    $region14: #{autoencoder_forward.1} parent=1 // pred_check
      _
    $region15: #{autoencoder_forward.1} parent=1 // pred_check_branch
      %31 = sbr.rel (0) target = $region17
    $region16: #{autoencoder_forward.1} parent=1 // pred_region
      _
    $region17: #{autoencoder_forward.1} parent=1 // pred_fallthru
      _
    // Predicated region
    $region18: #{autoencoder_forward.1} parent=1 // pred_check
      _
    $region19: #{autoencoder_forward.1} parent=1 // pred_check_branch
      %33 = sbr.rel (0) target = $region21
    $region20: #{autoencoder_forward.1} parent=1 // pred_region
      %35 = vsyncadd [#allocation6], 0
      %s37 = sshll.u32 %s4, 4
      %s38 = int_to_ptr.hbm [resolvable:$true] %s37
      %s39 = sshll.u32 [#allocation5], 4
      %s40 = int_to_ptr.vmem [resolvable:$true] %s39
      %42 = dma.hbm_to_vmem [thread:$0]  %s38, 112, %s40, [#allocation6]
    $region21: #{autoencoder_forward.1} parent=1 // pred_fallthru
      _
    // Predicated region
    $region22: #{autoencoder_forward.1} parent=1 // pred_check
      _
    $region23: #{autoencoder_forward.1} parent=1 // pred_check_branch
      %44 = sbr.rel (0) target = $region25
    $region24: #{autoencoder_forward.1} parent=1 // pred_region
      %46 = dma.done [#allocation3], 16
    $region25: #{autoencoder_forward.1} parent=1 // pred_fallthru
      _
    // Predicated region
    $region26: #{autoencoder_forward.1} parent=1 // pred_check
      _
    $region27: #{autoencoder_forward.1} parent=1 // pred_check_branch
      %48 = sbr.rel (0) target = $region29
    $region28: #{autoencoder_forward.1} parent=1 // pred_region
      %50 = dma.done [#allocation6], 112
    $region29: #{autoencoder_forward.1} parent=1 // pred_fallthru
      _
    %v52 = vld [vmem:[%s0] sm:$0xff]
    %v53 = vld [vmem:[%s0 + $0x8] sm:$0xff]
    %v54 = vld [vmem:[%s0 + $0x10] sm:$0xff]
    %v55 = vld [vmem:[%s0 + $0x18] sm:$0xff]
    %v56 = vld [vmem:[%s0 + $0x20] sm:$0xff]
    %v57 = vld [vmem:[%s0 + $0x28] sm:$0xff]
    %v58 = vld [vmem:[%s0 + $0x30] sm:$0xff]
    %v59 = vld [vmem:[%s0 + $0x38] sm:$0xff]
    %v60 = vld [vmem:[%s0 + $0x40] sm:$0xff]
    %v61 = vld [vmem:[%s0 + $0x48] sm:$0xff]
    %v62 = vld [vmem:[%s0 + $0x50] sm:$0xff]
    %v63 = vld [vmem:[%s0 + $0x58] sm:$0xff]
    %v64 = vld [vmem:[%s0 + $0x60] sm:$0xff]
    %v65 = vld [vmem:[%s0 + $0x68] sm:$0xff]
    %v66 = vld [vmem:[%s0 + $0x70] sm:$0xff]
    %v67 = vld [vmem:[%s0 + $0x78] sm:$0xff]
    %v68 = vld [vmem:[%s0 + $0x80] sm:$0xff]
    %v69 = vld [vmem:[%s0 + $0x88] sm:$0xff]
    %v70 = vld [vmem:[%s0 + $0x90] sm:$0xff]
    %v71 = vld [vmem:[%s0 + $0x98] sm:$0xff]
    %v72 = vld [vmem:[%s0 + $0xa0] sm:$0xff]
    %v73 = vld [vmem:[%s0 + $0xa8] sm:$0xff]
    %v74 = vld [vmem:[%s0 + $0xb0] sm:$0xff]
    %v75 = vld [vmem:[%s0 + $0xb8] sm:$0xff]
    %v76 = vld [vmem:[%s0 + $0xc0] sm:$0xff]
    %v77 = vld [vmem:[%s0 + $0xc8] sm:$0xff]
    %v78 = vld [vmem:[%s0 + $0xd0] sm:$0xff]
    %v79 = vld [vmem:[%s0 + $0xd8] sm:$0xff]
    %v80 = vld [vmem:[%s0 + $0xe0] sm:$0xff]
    %v81 = vld [vmem:[%s0 + $0xe8] sm:$0xff]
    %v82 = vld [vmem:[%s0 + $0xf0] sm:$0xff]
    %v83 = vld [vmem:[%s0 + $0xf8] sm:$0xff]
    %v84 = vld [vmem:[%s0 + $0x100] sm:$0xff]
    %v85 = vld [vmem:[%s0 + $0x108] sm:$0xff]
    %v86 = vld [vmem:[%s0 + $0x110] sm:$0xff]
    %v87 = vld [vmem:[%s0 + $0x118] sm:$0xff]
    %v88 = vld [vmem:[%s0 + $0x120] sm:$0xff]
    %v89 = vld [vmem:[%s0 + $0x128] sm:$0xff]
    %v90 = vld [vmem:[%s0 + $0x130] sm:$0xff]
    %v91 = vld [vmem:[%s0 + $0x138] sm:$0xff]
    %v92 = vld [vmem:[%s0 + $0x140] sm:$0xff]
    %v93 = vld [vmem:[%s0 + $0x148] sm:$0xff]
    %v94 = vld [vmem:[%s0 + $0x150] sm:$0xff]
    %v95 = vld [vmem:[%s0 + $0x158] sm:$0xff]
    %v96 = vld [vmem:[%s0 + $0x160] sm:$0xff]
    %v97 = vld [vmem:[%s0 + $0x168] sm:$0xff]
    %v98 = vld [vmem:[%s0 + $0x170] sm:$0xff]
    %v99 = vld [vmem:[%s0 + $0x178] sm:$0xff]
    %v100 = vld [vmem:[%s0 + $0x180] sm:$0xff]
    %v101 = vld [vmem:[%s0 + $0x188] sm:$0xff]
    %v102 = vld [vmem:[%s0 + $0x190] sm:$0xff]
    %v103 = vld [vmem:[%s0 + $0x198] sm:$0xff]
    %v104 = vld [vmem:[%s0 + $0x1a0] sm:$0xff]
    %v105 = vld [vmem:[%s0 + $0x1a8] sm:$0xff]
    %v106 = vld [vmem:[%s0 + $0x1b0] sm:$0xff]
    %v107 = vld [vmem:[%s0 + $0x1b8] sm:$0xff]
    %v108 = vpack.c.bf16 %v59, %v52
    %v109 = vpack.c.bf16 %v60, %v53
    %v110 = vpack.c.bf16 %v61, %v54
    %v111 = vpack.c.bf16 %v62, %v55
    %v112 = vpack.c.bf16 %v63, %v56
    %v113 = vpack.c.bf16 %v64, %v57
    %v114 = vpack.c.bf16 %v65, %v58
    %v115 = vpack.c.bf16 %v73, %v66
    %v116 = vpack.c.bf16 %v74, %v67
    %v117 = vpack.c.bf16 %v75, %v68
    %v118 = vpack.c.bf16 %v76, %v69
    %v119 = vpack.c.bf16 %v77, %v70
    %v120 = vpack.c.bf16 %v78, %v71
    %v121 = vpack.c.bf16 %v79, %v72
    %v122 = vpack.c.bf16 %v87, %v80
    %v123 = vpack.c.bf16 %v88, %v81
    %v124 = vpack.c.bf16 %v89, %v82
    %v125 = vpack.c.bf16 %v90, %v83
    %v126 = vpack.c.bf16 %v91, %v84
    %v127 = vpack.c.bf16 %v92, %v85
    %v128 = vpack.c.bf16 %v93, %v86
    %v129 = vpack.c.bf16 %v101, %v94
    %v130 = vpack.c.bf16 %v102, %v95
    %v131 = vpack.c.bf16 %v103, %v96
    %v132 = vpack.c.bf16 %v104, %v97
    %v133 = vpack.c.bf16 %v105, %v98
    %v134 = vpack.c.bf16 %v106, %v99
    %v135 = vpack.c.bf16 %v107, %v100
    %v136 = vld [vmem:[%s1] sm:$0xf]
    %v137 = vld [vmem:[%s1 + $0x4] sm:$0xf]
    %v138 = vld [vmem:[%s1 + $0x8] sm:$0xf]
    %v139 = vld [vmem:[%s1 + $0xc] sm:$0xf]
    %v140 = vld [vmem:[%s1 + $0x10] sm:$0xf]
    %v141 = vld [vmem:[%s1 + $0x14] sm:$0xf]
    %v142 = vld [vmem:[%s1 + $0x18] sm:$0xf]
    %v143 = vld [vmem:[%s1 + $0x1c] sm:$0xf]
    %v144 = vld [vmem:[%s1 + $0x20] sm:$0xf]
    %v145 = vld [vmem:[%s1 + $0x24] sm:$0xf]
    %v146 = vld [vmem:[%s1 + $0x28] sm:$0xf]
    %v147 = vld [vmem:[%s1 + $0x2c] sm:$0xf]
    %v148 = vld [vmem:[%s1 + $0x30] sm:$0xf]
    %v149 = vld [vmem:[%s1 + $0x34] sm:$0xf]
    %v150 = vld [vmem:[%s1 + $0x38] sm:$0xf]
    %v151 = vld [vmem:[%s1 + $0x3c] sm:$0xf]
    %v152 = vld [vmem:[%s1 + $0x40] sm:$0xf]
    %v153 = vld [vmem:[%s1 + $0x44] sm:$0xf]
    %v154 = vld [vmem:[%s1 + $0x48] sm:$0xf]
    %v155 = vld [vmem:[%s1 + $0x4c] sm:$0xf]
    %v156 = vld [vmem:[%s1 + $0x50] sm:$0xf]
    %v157 = vld [vmem:[%s1 + $0x54] sm:$0xf]
    %v158 = vld [vmem:[%s1 + $0x58] sm:$0xf]
    %v159 = vld [vmem:[%s1 + $0x5c] sm:$0xf]
    %v160 = vld [vmem:[%s1 + $0x60] sm:$0xf]
    %v161 = vld [vmem:[%s1 + $0x64] sm:$0xf]
    %v162 = vld [vmem:[%s1 + $0x68] sm:$0xf]
    %v163 = vld [vmem:[%s1 + $0x6c] sm:$0xf]
    %v164 = vld [vmem:[%s1 + $0x70] sm:$0xf]
    %v165 = vld [vmem:[%s1 + $0x74] sm:$0xf]
    %v166 = vld [vmem:[%s1 + $0x78] sm:$0xf]
    %v167 = vld [vmem:[%s1 + $0x7c] sm:$0xf]
    %v168 = vld [vmem:[%s1 + $0x80] sm:$0xf]
    %v169 = vld [vmem:[%s1 + $0x84] sm:$0xf]
    %v170 = vld [vmem:[%s1 + $0x88] sm:$0xf]
    %v171 = vld [vmem:[%s1 + $0x8c] sm:$0xf]
    %v172 = vld [vmem:[%s1 + $0x90] sm:$0xf]
    %v173 = vld [vmem:[%s1 + $0x94] sm:$0xf]
    %v174 = vld [vmem:[%s1 + $0x98] sm:$0xf]
    %v175 = vld [vmem:[%s1 + $0x9c] sm:$0xf]
    %v176 = vld [vmem:[%s1 + $0xa0] sm:$0xf]
    %v177 = vld [vmem:[%s1 + $0xa4] sm:$0xf]
    %v178 = vld [vmem:[%s1 + $0xa8] sm:$0xf]
    %v179 = vld [vmem:[%s1 + $0xac] sm:$0xf]
    %v180 = vld [vmem:[%s1 + $0xb0] sm:$0xf]
    %v181 = vld [vmem:[%s1 + $0xb4] sm:$0xf]
    %v182 = vld [vmem:[%s1 + $0xb8] sm:$0xf]
    %v183 = vld [vmem:[%s1 + $0xbc] sm:$0xf]
    %v184 = vld [vmem:[%s1 + $0xc0] sm:$0xf]
    %v185 = vld [vmem:[%s1 + $0xc4] sm:$0xf]
    %v186 = vld [vmem:[%s1 + $0xc8] sm:$0xf]
    %v187 = vld [vmem:[%s1 + $0xcc] sm:$0xf]
    %v188 = vld [vmem:[%s1 + $0xd0] sm:$0xf]
    %v189 = vld [vmem:[%s1 + $0xd4] sm:$0xf]
    %v190 = vld [vmem:[%s1 + $0xd8] sm:$0xf]
    %v191 = vld [vmem:[%s1 + $0xdc] sm:$0xf]
    %v192 = vld [vmem:[%s1 + $0xe0] sm:$0xf]
    %v193 = vld [vmem:[%s1 + $0xe4] sm:$0xf]
    %v194 = vld [vmem:[%s1 + $0xe8] sm:$0xf]
    %v195 = vld [vmem:[%s1 + $0xec] sm:$0xf]
    %v196 = vld [vmem:[%s1 + $0xf0] sm:$0xf]
    %v197 = vld [vmem:[%s1 + $0xf4] sm:$0xf]
    %v198 = vld [vmem:[%s1 + $0xf8] sm:$0xf]
    %v199 = vld [vmem:[%s1 + $0xfc] sm:$0xf]
    %v200 = vld [vmem:[%s1 + $0x100] sm:$0xf]
    %v201 = vld [vmem:[%s1 + $0x104] sm:$0xf]
    %v202 = vld [vmem:[%s1 + $0x108] sm:$0xf]
    %v203 = vld [vmem:[%s1 + $0x10c] sm:$0xf]
    %v204 = vld [vmem:[%s1 + $0x110] sm:$0xf]
    %v205 = vld [vmem:[%s1 + $0x114] sm:$0xf]
    %v206 = vld [vmem:[%s1 + $0x118] sm:$0xf]
    %v207 = vld [vmem:[%s1 + $0x11c] sm:$0xf]
    %v208 = vld [vmem:[%s1 + $0x120] sm:$0xf]
    %v209 = vld [vmem:[%s1 + $0x124] sm:$0xf]
    %v210 = vld [vmem:[%s1 + $0x128] sm:$0xf]
    %v211 = vld [vmem:[%s1 + $0x12c] sm:$0xf]
    %v212 = vld [vmem:[%s1 + $0x130] sm:$0xf]
    %v213 = vld [vmem:[%s1 + $0x134] sm:$0xf]
    %v214 = vld [vmem:[%s1 + $0x138] sm:$0xf]
    %v215 = vld [vmem:[%s1 + $0x13c] sm:$0xf]
    %v216 = vld [vmem:[%s1 + $0x140] sm:$0xf]
    %v217 = vld [vmem:[%s1 + $0x144] sm:$0xf]
    %v218 = vld [vmem:[%s1 + $0x148] sm:$0xf]
    %v219 = vld [vmem:[%s1 + $0x14c] sm:$0xf]
    %v220 = vld [vmem:[%s1 + $0x150] sm:$0xf]
    %v221 = vld [vmem:[%s1 + $0x154] sm:$0xf]
    %v222 = vld [vmem:[%s1 + $0x158] sm:$0xf]
    %v223 = vld [vmem:[%s1 + $0x15c] sm:$0xf]
    %v224 = vld [vmem:[%s1 + $0x160] sm:$0xf]
    %v225 = vld [vmem:[%s1 + $0x164] sm:$0xf]
    %v226 = vld [vmem:[%s1 + $0x168] sm:$0xf]
    %v227 = vld [vmem:[%s1 + $0x16c] sm:$0xf]
    %v228 = vld [vmem:[%s1 + $0x170] sm:$0xf]
    %v229 = vld [vmem:[%s1 + $0x174] sm:$0xf]
    %v230 = vld [vmem:[%s1 + $0x178] sm:$0xf]
    %v231 = vld [vmem:[%s1 + $0x17c] sm:$0xf]
    %v232 = vld [vmem:[%s1 + $0x180] sm:$0xf]
    %v233 = vld [vmem:[%s1 + $0x184] sm:$0xf]
    %v234 = vld [vmem:[#allocation2] sm:$0x1]
    %v236 = vperm.slane %v234, 0
    %v336 = vunpack.c.l.b16 %v136
    %v337 = vunpack.c.l.b16 %v137
    %v338 = vunpack.c.l.b16 %v138
    %v339 = vunpack.c.l.b16 %v139
    %v340 = vunpack.c.l.b16 %v140
    %v341 = vunpack.c.l.b16 %v141
    %v342 = vunpack.c.l.b16 %v142
    %v343 = vunpack.c.l.b16 %v143
    %v344 = vunpack.c.l.b16 %v144
    %v345 = vunpack.c.l.b16 %v145
    %v346 = vunpack.c.l.b16 %v146
    %v347 = vunpack.c.l.b16 %v147
    %v348 = vunpack.c.l.b16 %v148
    %v349 = vunpack.c.l.b16 %v149
    %v350 = vunpack.c.l.b16 %v150
    %v351 = vunpack.c.l.b16 %v151
    %v352 = vunpack.c.l.b16 %v152
    %v353 = vunpack.c.l.b16 %v153
    %v354 = vunpack.c.l.b16 %v154
    %v355 = vunpack.c.l.b16 %v155
    %v356 = vunpack.c.l.b16 %v156
    %v357 = vunpack.c.l.b16 %v157
    %v358 = vunpack.c.l.b16 %v158
    %v359 = vunpack.c.l.b16 %v159
    %v360 = vunpack.c.l.b16 %v160
    %v361 = vunpack.c.l.b16 %v161
    %v362 = vunpack.c.l.b16 %v162
    %v363 = vunpack.c.l.b16 %v163
    %v364 = vunpack.c.l.b16 %v164
    %v365 = vunpack.c.l.b16 %v165
    %v366 = vunpack.c.l.b16 %v166
    %v367 = vunpack.c.l.b16 %v167
    %v368 = vunpack.c.l.b16 %v168
    %v369 = vunpack.c.l.b16 %v169
    %v370 = vunpack.c.l.b16 %v170
    %v371 = vunpack.c.l.b16 %v171
    %v372 = vunpack.c.l.b16 %v172
    %v373 = vunpack.c.l.b16 %v173
    %v374 = vunpack.c.l.b16 %v174
    %v375 = vunpack.c.l.b16 %v175
    %v376 = vunpack.c.l.b16 %v176
    %v377 = vunpack.c.l.b16 %v177
    %v378 = vunpack.c.l.b16 %v178
    %v379 = vunpack.c.l.b16 %v179
    %v380 = vunpack.c.l.b16 %v180
    %v381 = vunpack.c.l.b16 %v181
    %v382 = vunpack.c.l.b16 %v182
    %v383 = vunpack.c.l.b16 %v183
    %v384 = vunpack.c.l.b16 %v184
    %v385 = vunpack.c.l.b16 %v185
    %v386 = vunpack.c.l.b16 %v186
    %v387 = vunpack.c.l.b16 %v187
    %v388 = vunpack.c.l.b16 %v188
    %v389 = vunpack.c.l.b16 %v189
    %v390 = vunpack.c.l.b16 %v190
    %v391 = vunpack.c.l.b16 %v191
    %v392 = vunpack.c.l.b16 %v192
    %v393 = vunpack.c.l.b16 %v193
    %v394 = vunpack.c.l.b16 %v194
    %v395 = vunpack.c.l.b16 %v195
    %v396 = vunpack.c.l.b16 %v196
    %v397 = vunpack.c.l.b16 %v197
    %v398 = vunpack.c.l.b16 %v198
    %v399 = vunpack.c.l.b16 %v199
    %v400 = vunpack.c.l.b16 %v200
    %v401 = vunpack.c.l.b16 %v201
    %v402 = vunpack.c.l.b16 %v202
    %v403 = vunpack.c.l.b16 %v203
    %v404 = vunpack.c.l.b16 %v204
    %v405 = vunpack.c.l.b16 %v205
    %v406 = vunpack.c.l.b16 %v206
    %v407 = vunpack.c.l.b16 %v207
    %v408 = vunpack.c.l.b16 %v208
    %v409 = vunpack.c.l.b16 %v209
    %v410 = vunpack.c.l.b16 %v210
    %v411 = vunpack.c.l.b16 %v211
    %v412 = vunpack.c.l.b16 %v212
    %v413 = vunpack.c.l.b16 %v213
    %v414 = vunpack.c.l.b16 %v214
    %v415 = vunpack.c.l.b16 %v215
    %v416 = vunpack.c.l.b16 %v216
    %v417 = vunpack.c.l.b16 %v217
    %v418 = vunpack.c.l.b16 %v218
    %v419 = vunpack.c.l.b16 %v219
    %v420 = vunpack.c.l.b16 %v220
    %v421 = vunpack.c.l.b16 %v221
    %v422 = vunpack.c.l.b16 %v222
    %v423 = vunpack.c.l.b16 %v223
    %v424 = vunpack.c.l.b16 %v224
    %v425 = vunpack.c.l.b16 %v225
    %v426 = vunpack.c.l.b16 %v226
    %v427 = vunpack.c.l.b16 %v227
    %v428 = vunpack.c.l.b16 %v228
    %v429 = vunpack.c.l.b16 %v229
    %v430 = vunpack.c.l.b16 %v230
    %v431 = vunpack.c.l.b16 %v231
    %v432 = vunpack.c.l.b16 %v232
    %v433 = vunpack.c.l.b16 %v233
    %v434 = vpack.c.b16 %v337, %v336
    %v435 = vpack.c.b16 %v339, %v338
    %v436 = vpack.c.b16 %v341, %v340
    %v437 = vpack.c.b16 %v343, %v342
    %v438 = vpack.c.b16 %v345, %v344
    %v439 = vpack.c.b16 %v347, %v346
    %v440 = vpack.c.b16 %v349, %v348
    %v441 = vpack.c.b16 %v351, %v350
    %v442 = vpack.c.b16 %v353, %v352
    %v443 = vpack.c.b16 %v355, %v354
    %v444 = vpack.c.b16 %v357, %v356
    %v445 = vpack.c.b16 %v359, %v358
    %v446 = vpack.c.b16 %v361, %v360
    %v447 = vpack.c.b16 %v363, %v362
    %v448 = vpack.c.b16 %v365, %v364
    %v449 = vpack.c.b16 %v367, %v366
    %v450 = vpack.c.b16 %v369, %v368
    %v451 = vpack.c.b16 %v371, %v370
    %v452 = vpack.c.b16 %v373, %v372
    %v453 = vpack.c.b16 %v375, %v374
    %v454 = vpack.c.b16 %v377, %v376
    %v455 = vpack.c.b16 %v379, %v378
    %v456 = vpack.c.b16 %v381, %v380
    %v457 = vpack.c.b16 %v383, %v382
    %v458 = vpack.c.b16 %v385, %v384
    %v459 = vpack.c.b16 %v387, %v386
    %v460 = vpack.c.b16 %v389, %v388
    %v461 = vpack.c.b16 %v391, %v390
    %v462 = vpack.c.b16 %v393, %v392
    %v463 = vpack.c.b16 %v395, %v394
    %v464 = vpack.c.b16 %v397, %v396
    %v465 = vpack.c.b16 %v399, %v398
    %v466 = vpack.c.b16 %v401, %v400
    %v467 = vpack.c.b16 %v403, %v402
    %v468 = vpack.c.b16 %v405, %v404
    %v469 = vpack.c.b16 %v407, %v406
    %v470 = vpack.c.b16 %v409, %v408
    %v471 = vpack.c.b16 %v411, %v410
    %v472 = vpack.c.b16 %v413, %v412
    %v473 = vpack.c.b16 %v415, %v414
    %v474 = vpack.c.b16 %v417, %v416
    %v475 = vpack.c.b16 %v419, %v418
    %v476 = vpack.c.b16 %v421, %v420
    %v477 = vpack.c.b16 %v423, %v422
    %v478 = vpack.c.b16 %v425, %v424
    %v479 = vpack.c.b16 %v427, %v426
    %v480 = vpack.c.b16 %v429, %v428
    %v481 = vpack.c.b16 %v431, %v430
    %v482 = vpack.c.b16 %v433, %v432
    %vm532 = vcmask 130048
    %v534 = vsel %vm532, %v114, 0
    %v537 = vsel %vm532, %v121, 0
    %v540 = vsel %vm532, %v128, 0
    %v543 = vsel %vm532, %v135, 0
    %545 = vmatpush.bf16.msra.mxu0 %v441
    %546 = vmatpush.bf16.msra.mxu0 %v440
    %547 = vmatpush.bf16.msra.mxu0 %v439
    %548 = vmatpush.bf16.msra.mxu0 %v438
    %549 = vmatpush.bf16.msra.mxu0 %v437
    %550 = vmatpush.bf16.msra.mxu0 %v436
    %551 = vmatpush.bf16.msra.mxu0 %v435
    %552 = vmatpush.bf16.msra.mxu0 %v434
    %553 = vmatmul.bf16.gmra.mxu0 %v108
    %v554 = vpop.f32.mrf.mxu0
    %v555 = vadd.f32 %v236, %v554
    %v556 = vpop.f32.mrf.mxu0
    %v557 = vadd.f32 %v236, %v556
    %558 = vmatmul.bf16.gmra.mxu0 %v115
    %v559 = vpop.f32.mrf.mxu0
    %v560 = vadd.f32 %v236, %v559
    %v561 = vpop.f32.mrf.mxu0
    %v562 = vadd.f32 %v236, %v561
    %563 = vmatmul.bf16.gmra.mxu0 %v122
    %v564 = vpop.f32.mrf.mxu0
    %v565 = vadd.f32 %v236, %v564
    %v566 = vpop.f32.mrf.mxu0
    %v567 = vadd.f32 %v236, %v566
    %568 = vmatmul.bf16.gmra.mxu0 %v129
    %v569 = vpop.f32.mrf.mxu0
    %v570 = vadd.f32 %v236, %v569
    %v571 = vpop.f32.mrf.mxu0
    %v572 = vadd.f32 %v236, %v571
    %573 = vdwg.mxu0
    %574 = vmatpush.bf16.msra.mxu0 %v449
    %575 = vmatpush.bf16.msra.mxu0 %v448
    %576 = vmatpush.bf16.msra.mxu0 %v447
    %577 = vmatpush.bf16.msra.mxu0 %v446
    %578 = vmatpush.bf16.msra.mxu0 %v445
    %579 = vmatpush.bf16.msra.mxu0 %v444
    %580 = vmatpush.bf16.msra.mxu0 %v443
    %581 = vmatpush.bf16.msra.mxu0 %v442
    %582 = vmatmul.bf16.gmra.mxu0 %v109
    %v583 = vpop.f32.mrf.mxu0
    %v584 = vadd.f32 %v555, %v583
    %v585 = vpop.f32.mrf.mxu0
    %v586 = vadd.f32 %v557, %v585
    %587 = vmatmul.bf16.gmra.mxu0 %v116
    %v588 = vpop.f32.mrf.mxu0
    %v589 = vadd.f32 %v560, %v588
    %v590 = vpop.f32.mrf.mxu0
    %v591 = vadd.f32 %v562, %v590
    %592 = vmatmul.bf16.gmra.mxu0 %v123
    %v593 = vpop.f32.mrf.mxu0
    %v594 = vadd.f32 %v565, %v593
    %v595 = vpop.f32.mrf.mxu0
    %v596 = vadd.f32 %v567, %v595
    %597 = vmatmul.bf16.gmra.mxu0 %v130
    %v598 = vpop.f32.mrf.mxu0
    %v599 = vadd.f32 %v570, %v598
    %v600 = vpop.f32.mrf.mxu0
    %v601 = vadd.f32 %v572, %v600
    %602 = vdwg.mxu0
    %603 = vmatpush.bf16.msra.mxu0 %v457
    %604 = vmatpush.bf16.msra.mxu0 %v456
    %605 = vmatpush.bf16.msra.mxu0 %v455
    %606 = vmatpush.bf16.msra.mxu0 %v454
    %607 = vmatpush.bf16.msra.mxu0 %v453
    %608 = vmatpush.bf16.msra.mxu0 %v452
    %609 = vmatpush.bf16.msra.mxu0 %v451
    %610 = vmatpush.bf16.msra.mxu0 %v450
    %611 = vmatmul.bf16.gmra.mxu0 %v110
    %v612 = vpop.f32.mrf.mxu0
    %v613 = vadd.f32 %v584, %v612
    %v614 = vpop.f32.mrf.mxu0
    %v615 = vadd.f32 %v586, %v614
    %616 = vmatmul.bf16.gmra.mxu0 %v117
    %v617 = vpop.f32.mrf.mxu0
    %v618 = vadd.f32 %v589, %v617
    %v619 = vpop.f32.mrf.mxu0
    %v620 = vadd.f32 %v591, %v619
    %621 = vmatmul.bf16.gmra.mxu0 %v124
    %v622 = vpop.f32.mrf.mxu0
    %v623 = vadd.f32 %v594, %v622
    %v624 = vpop.f32.mrf.mxu0
    %v625 = vadd.f32 %v596, %v624
    %626 = vmatmul.bf16.gmra.mxu0 %v131
    %v627 = vpop.f32.mrf.mxu0
    %v628 = vadd.f32 %v599, %v627
    %v629 = vpop.f32.mrf.mxu0
    %v630 = vadd.f32 %v601, %v629
    %631 = vdwg.mxu0
    %632 = vmatpush.bf16.msra.mxu0 %v465
    %633 = vmatpush.bf16.msra.mxu0 %v464
    %634 = vmatpush.bf16.msra.mxu0 %v463
    %635 = vmatpush.bf16.msra.mxu0 %v462
    %636 = vmatpush.bf16.msra.mxu0 %v461
    %637 = vmatpush.bf16.msra.mxu0 %v460
    %638 = vmatpush.bf16.msra.mxu0 %v459
    %639 = vmatpush.bf16.msra.mxu0 %v458
    %640 = vmatmul.bf16.gmra.mxu0 %v111
    %v641 = vpop.f32.mrf.mxu0
    %v642 = vadd.f32 %v613, %v641
    %v643 = vpop.f32.mrf.mxu0
    %v644 = vadd.f32 %v615, %v643
    %645 = vmatmul.bf16.gmra.mxu0 %v118
    %v646 = vpop.f32.mrf.mxu0
    %v647 = vadd.f32 %v618, %v646
    %v648 = vpop.f32.mrf.mxu0
    %v649 = vadd.f32 %v620, %v648
    %650 = vmatmul.bf16.gmra.mxu0 %v125
    %v651 = vpop.f32.mrf.mxu0
    %v652 = vadd.f32 %v623, %v651
    %v653 = vpop.f32.mrf.mxu0
    %v654 = vadd.f32 %v625, %v653
    %655 = vmatmul.bf16.gmra.mxu0 %v132
    %v656 = vpop.f32.mrf.mxu0
    %v657 = vadd.f32 %v628, %v656
    %v658 = vpop.f32.mrf.mxu0
    %v659 = vadd.f32 %v630, %v658
    %660 = vdwg.mxu0
    %661 = vmatpush.bf16.msra.mxu0 %v473
    %662 = vmatpush.bf16.msra.mxu0 %v472
    %663 = vmatpush.bf16.msra.mxu0 %v471
    %664 = vmatpush.bf16.msra.mxu0 %v470
    %665 = vmatpush.bf16.msra.mxu0 %v469
    %666 = vmatpush.bf16.msra.mxu0 %v468
    %667 = vmatpush.bf16.msra.mxu0 %v467
    %668 = vmatpush.bf16.msra.mxu0 %v466
    %669 = vmatmul.bf16.gmra.mxu0 %v112
    %v670 = vpop.f32.mrf.mxu0
    %v671 = vadd.f32 %v642, %v670
    %v672 = vpop.f32.mrf.mxu0
    %v673 = vadd.f32 %v644, %v672
    %674 = vmatmul.bf16.gmra.mxu0 %v119
    %v675 = vpop.f32.mrf.mxu0
    %v676 = vadd.f32 %v647, %v675
    %v677 = vpop.f32.mrf.mxu0
    %v678 = vadd.f32 %v649, %v677
    %679 = vmatmul.bf16.gmra.mxu0 %v126
    %v680 = vpop.f32.mrf.mxu0
    %v681 = vadd.f32 %v652, %v680
    %v682 = vpop.f32.mrf.mxu0
    %v683 = vadd.f32 %v654, %v682
    %684 = vmatmul.bf16.gmra.mxu0 %v133
    %v685 = vpop.f32.mrf.mxu0
    %v686 = vadd.f32 %v657, %v685
    %v687 = vpop.f32.mrf.mxu0
    %v688 = vadd.f32 %v659, %v687
    %689 = vdwg.mxu0
    %690 = vmatpush.bf16.msra.mxu0 %v481
    %691 = vmatpush.bf16.msra.mxu0 %v480
    %692 = vmatpush.bf16.msra.mxu0 %v479
    %693 = vmatpush.bf16.msra.mxu0 %v478
    %694 = vmatpush.bf16.msra.mxu0 %v477
    %695 = vmatpush.bf16.msra.mxu0 %v476
    %696 = vmatpush.bf16.msra.mxu0 %v475
    %697 = vmatpush.bf16.msra.mxu0 %v474
    %698 = vmatmul.bf16.gmra.mxu0 %v113
    %v699 = vpop.f32.mrf.mxu0
    %v700 = vadd.f32 %v671, %v699
    %v701 = vpop.f32.mrf.mxu0
    %v702 = vadd.f32 %v673, %v701
    %703 = vmatmul.bf16.gmra.mxu0 %v120
    %v704 = vpop.f32.mrf.mxu0
    %v705 = vadd.f32 %v676, %v704
    %v706 = vpop.f32.mrf.mxu0
    %v707 = vadd.f32 %v678, %v706
    %708 = vmatmul.bf16.gmra.mxu0 %v127
    %v709 = vpop.f32.mrf.mxu0
    %v710 = vadd.f32 %v681, %v709
    %v711 = vpop.f32.mrf.mxu0
    %v712 = vadd.f32 %v683, %v711
    %713 = vmatmul.bf16.gmra.mxu0 %v134
    %v714 = vpop.f32.mrf.mxu0
    %v715 = vadd.f32 %v686, %v714
    %v716 = vpop.f32.mrf.mxu0
    %v717 = vadd.f32 %v688, %v716
    %718 = vdwg.mxu0
    %719 = vmatpush.bf16.msra.mxu0 0
    %720 = vmatpush.bf16.msra.mxu0 0
    %721 = vmatpush.bf16.msra.mxu0 0
    %722 = vmatpush.bf16.msra.mxu0 0
    %723 = vmatpush.bf16.msra.mxu0 0
    %724 = vmatpush.bf16.msra.mxu0 0
    %725 = vmatpush.bf16.msra.mxu0 0
    %726 = vmatpush.bf16.msra.mxu0 %v482
    %727 = vmatmul.bf16.gmra.mxu0 %v534
    %v728 = vpop.f32.mrf.mxu0
    %v729 = vadd.f32 %v700, %v728
    %v730 = vpop.f32.mrf.mxu0
    %v731 = vadd.f32 %v702, %v730
    %732 = vmatmul.bf16.gmra.mxu0 %v537
    %v733 = vpop.f32.mrf.mxu0
    %v734 = vadd.f32 %v705, %v733
    %v735 = vpop.f32.mrf.mxu0
    %v736 = vadd.f32 %v707, %v735
    %737 = vmatmul.bf16.gmra.mxu0 %v540
    %v738 = vpop.f32.mrf.mxu0
    %v739 = vadd.f32 %v710, %v738
    %v740 = vpop.f32.mrf.mxu0
    %v741 = vadd.f32 %v712, %v740
    %742 = vmatmul.bf16.gmra.mxu0 %v543
    %v743 = vpop.f32.mrf.mxu0
    %v744 = vadd.f32 %v715, %v743
    %v745 = vpop.f32.mrf.mxu0
    %v746 = vadd.f32 %v717, %v745
    %747 = vdwg.mxu0
    %v748 = vmax.f32 %v729, 0.0
    %v749 = vmax.f32 %v731, 0.0
    %v750 = vmax.f32 %v734, 0.0
    %v751 = vmax.f32 %v736, 0.0
    %v752 = vmax.f32 %v739, 0.0
    %v753 = vmax.f32 %v741, 0.0
    %v754 = vmax.f32 %v744, 0.0
    %v755 = vmax.f32 %v746, 0.0
    %vm756 = vcmask 244736
    %757 = vst.msk [vmem:[%s5] sm:$0xff] %vm756, %v748
    %758 = vst.msk [vmem:[%s5 + $0x8] sm:$0xff] %vm756, %v749
    %759 = vst.msk [vmem:[%s5 + $0x10] sm:$0xff] %vm756, %v750
    %760 = vst.msk [vmem:[%s5 + $0x18] sm:$0xff] %vm756, %v751
    %761 = vst.msk [vmem:[%s5 + $0x20] sm:$0xff] %vm756, %v752
    %762 = vst.msk [vmem:[%s5 + $0x28] sm:$0xff] %vm756, %v753
    %763 = vst.msk [vmem:[%s5 + $0x30] sm:$0xff] %vm756, %v754
    %764 = vst.msk [vmem:[%s5 + $0x38] sm:$0xff] %vm756, %v755
    %v765 = vpack.c.bf16 %v749, %v748
    %v766 = vpack.c.bf16 %v751, %v750
    %v767 = vpack.c.bf16 %v753, %v752
    %v768 = vpack.c.bf16 %v755, %v754
    %v769 = vld [vmem:[%s3] sm:$0xff]
    %v770 = vld [vmem:[%s3 + $0x8] sm:$0xff]
    %v771 = vld [vmem:[%s3 + $0x10] sm:$0xff]
    %v772 = vld [vmem:[%s3 + $0x18] sm:$0xf]
    %v773 = vld [vmem:[%s3 + $0x1c] sm:$0xff]
    %v774 = vld [vmem:[%s3 + $0x24] sm:$0xff]
    %v775 = vld [vmem:[%s3 + $0x2c] sm:$0xff]
    %v776 = vld [vmem:[%s3 + $0x34] sm:$0xf]
    %v777 = vld [vmem:[%s3 + $0x38] sm:$0xff]
    %v778 = vld [vmem:[%s3 + $0x40] sm:$0xff]
    %v779 = vld [vmem:[%s3 + $0x48] sm:$0xff]
    %v780 = vld [vmem:[%s3 + $0x50] sm:$0xf]
    %v781 = vld [vmem:[%s3 + $0x54] sm:$0xff]
    %v782 = vld [vmem:[%s3 + $0x5c] sm:$0xff]
    %v783 = vld [vmem:[%s3 + $0x64] sm:$0xff]
    %v784 = vld [vmem:[%s3 + $0x6c] sm:$0xf]
    %v785 = vld [vmem:[%s3 + $0x70] sm:$0xff]
    %v786 = vld [vmem:[%s3 + $0x78] sm:$0xff]
    %v787 = vld [vmem:[%s3 + $0x80] sm:$0xff]
    %v788 = vld [vmem:[%s3 + $0x88] sm:$0xf]
    %v789 = vld [vmem:[%s3 + $0x8c] sm:$0xff]
    %v790 = vld [vmem:[%s3 + $0x94] sm:$0xff]
    %v791 = vld [vmem:[%s3 + $0x9c] sm:$0xff]
    %v792 = vld [vmem:[%s3 + $0xa4] sm:$0xf]
    %v793 = vld [vmem:[%s3 + $0xa8] sm:$0xff]
    %v794 = vld [vmem:[%s3 + $0xb0] sm:$0xff]
    %v795 = vld [vmem:[%s3 + $0xb8] sm:$0xff]
    %v796 = vld [vmem:[%s3 + $0xc0] sm:$0xf]
    %v797 = vld [vmem:[%s3 + $0xc4] sm:$0xff]
    %v798 = vld [vmem:[%s3 + $0xcc] sm:$0xff]
    %v799 = vld [vmem:[%s3 + $0xd4] sm:$0xff]
    %v800 = vld [vmem:[%s3 + $0xdc] sm:$0xf]
    %v801 = vld [vmem:[%s3 + $0xe0] sm:$0xff]
    %v802 = vld [vmem:[%s3 + $0xe8] sm:$0xff]
    %v803 = vld [vmem:[%s3 + $0xf0] sm:$0xff]
    %v804 = vld [vmem:[%s3 + $0xf8] sm:$0xf]
    %v805 = vld [vmem:[%s3 + $0xfc] sm:$0xff]
    %v806 = vld [vmem:[%s3 + $0x104] sm:$0xff]
    %v807 = vld [vmem:[%s3 + $0x10c] sm:$0xff]
    %v808 = vld [vmem:[%s3 + $0x114] sm:$0xf]
    %v809 = vld [vmem:[%s3 + $0x118] sm:$0xff]
    %v810 = vld [vmem:[%s3 + $0x120] sm:$0xff]
    %v811 = vld [vmem:[%s3 + $0x128] sm:$0xff]
    %v812 = vld [vmem:[%s3 + $0x130] sm:$0xf]
    %v813 = vld [vmem:[%s3 + $0x134] sm:$0xff]
    %v814 = vld [vmem:[%s3 + $0x13c] sm:$0xff]
    %v815 = vld [vmem:[%s3 + $0x144] sm:$0xff]
    %v816 = vld [vmem:[%s3 + $0x14c] sm:$0xf]
    %v817 = vld [vmem:[%s3 + $0x150] sm:$0xff]
    %v818 = vld [vmem:[%s3 + $0x158] sm:$0xff]
    %v819 = vld [vmem:[%s3 + $0x160] sm:$0xff]
    %v820 = vld [vmem:[%s3 + $0x168] sm:$0xf]
    %v821 = vld [vmem:[%s3 + $0x16c] sm:$0xff]
    %v822 = vld [vmem:[%s3 + $0x174] sm:$0xff]
    %v823 = vld [vmem:[%s3 + $0x17c] sm:$0xff]
    %v824 = vld [vmem:[%s3 + $0x184] sm:$0xf]
    %v825 = vld [vmem:[%s3 + $0x188] sm:$0xff]
    %v826 = vld [vmem:[%s3 + $0x190] sm:$0xff]
    %v827 = vld [vmem:[%s3 + $0x198] sm:$0xff]
    %v828 = vld [vmem:[%s3 + $0x1a0] sm:$0xf]
    %v829 = vld [vmem:[%s3 + $0x1a4] sm:$0xff]
    %v830 = vld [vmem:[%s3 + $0x1ac] sm:$0xff]
    %v831 = vld [vmem:[%s3 + $0x1b4] sm:$0xff]
    %v832 = vld [vmem:[%s3 + $0x1bc] sm:$0xf]
    %v833 = vld [vmem:[#allocation5] sm:$0x7f]
    %v835 = vperm.slane %v833, 0
    %v836 = vperm.slane %v833, 1
    %v837 = vperm.slane %v833, 2
    %v838 = vperm.slane %v833, 3
    %v839 = vperm.slane %v833, 4
    %v840 = vperm.slane %v833, 5
    %v841 = vperm.slane %v833, 6
    %v913 = vunpack.c.l.b16 %v769
    %v914 = vunpack.c.h.b16 %v769
    %v915 = vunpack.c.l.b16 %v770
    %v916 = vunpack.c.h.b16 %v770
    %v917 = vunpack.c.l.b16 %v771
    %v918 = vunpack.c.h.b16 %v771
    %v919 = vunpack.c.l.b16 %v772
    %v920 = vunpack.c.l.b16 %v773
    %v921 = vunpack.c.h.b16 %v773
    %v922 = vunpack.c.l.b16 %v774
    %v923 = vunpack.c.h.b16 %v774
    %v924 = vunpack.c.l.b16 %v775
    %v925 = vunpack.c.h.b16 %v775
    %v926 = vunpack.c.l.b16 %v776
    %v927 = vunpack.c.l.b16 %v777
    %v928 = vunpack.c.h.b16 %v777
    %v929 = vunpack.c.l.b16 %v778
    %v930 = vunpack.c.h.b16 %v778
    %v931 = vunpack.c.l.b16 %v779
    %v932 = vunpack.c.h.b16 %v779
    %v933 = vunpack.c.l.b16 %v780
    %v934 = vunpack.c.l.b16 %v781
    %v935 = vunpack.c.h.b16 %v781
    %v936 = vunpack.c.l.b16 %v782
    %v937 = vunpack.c.h.b16 %v782
    %v938 = vunpack.c.l.b16 %v783
    %v939 = vunpack.c.h.b16 %v783
    %v940 = vunpack.c.l.b16 %v784
    %v941 = vunpack.c.l.b16 %v785
    %v942 = vunpack.c.h.b16 %v785
    %v943 = vunpack.c.l.b16 %v786
    %v944 = vunpack.c.h.b16 %v786
    %v945 = vunpack.c.l.b16 %v787
    %v946 = vunpack.c.h.b16 %v787
    %v947 = vunpack.c.l.b16 %v788
    %v948 = vunpack.c.l.b16 %v789
    %v949 = vunpack.c.h.b16 %v789
    %v950 = vunpack.c.l.b16 %v790
    %v951 = vunpack.c.h.b16 %v790
    %v952 = vunpack.c.l.b16 %v791
    %v953 = vunpack.c.h.b16 %v791
    %v954 = vunpack.c.l.b16 %v792
    %v955 = vunpack.c.l.b16 %v793
    %v956 = vunpack.c.h.b16 %v793
    %v957 = vunpack.c.l.b16 %v794
    %v958 = vunpack.c.h.b16 %v794
    %v959 = vunpack.c.l.b16 %v795
    %v960 = vunpack.c.h.b16 %v795
    %v961 = vunpack.c.l.b16 %v796
    %v962 = vunpack.c.l.b16 %v797
    %v963 = vunpack.c.h.b16 %v797
    %v964 = vunpack.c.l.b16 %v798
    %v965 = vunpack.c.h.b16 %v798
    %v966 = vunpack.c.l.b16 %v799
    %v967 = vunpack.c.h.b16 %v799
    %v968 = vunpack.c.l.b16 %v800
    %v969 = vunpack.c.l.b16 %v801
    %v970 = vunpack.c.h.b16 %v801
    %v971 = vunpack.c.l.b16 %v802
    %v972 = vunpack.c.h.b16 %v802
    %v973 = vunpack.c.l.b16 %v803
    %v974 = vunpack.c.h.b16 %v803
    %v975 = vunpack.c.l.b16 %v804
    %v976 = vunpack.c.l.b16 %v805
    %v977 = vunpack.c.h.b16 %v805
    %v978 = vunpack.c.l.b16 %v806
    %v979 = vunpack.c.h.b16 %v806
    %v980 = vunpack.c.l.b16 %v807
    %v981 = vunpack.c.h.b16 %v807
    %v982 = vunpack.c.l.b16 %v808
    %v983 = vunpack.c.l.b16 %v809
    %v984 = vunpack.c.h.b16 %v809
    %v985 = vunpack.c.l.b16 %v810
    %v986 = vunpack.c.h.b16 %v810
    %v987 = vunpack.c.l.b16 %v811
    %v988 = vunpack.c.h.b16 %v811
    %v989 = vunpack.c.l.b16 %v812
    %v990 = vunpack.c.l.b16 %v813
    %v991 = vunpack.c.h.b16 %v813
    %v992 = vunpack.c.l.b16 %v814
    %v993 = vunpack.c.h.b16 %v814
    %v994 = vunpack.c.l.b16 %v815
    %v995 = vunpack.c.h.b16 %v815
    %v996 = vunpack.c.l.b16 %v816
    %v997 = vunpack.c.l.b16 %v817
    %v998 = vunpack.c.h.b16 %v817
    %v999 = vunpack.c.l.b16 %v818
    %v1000 = vunpack.c.h.b16 %v818
    %v1001 = vunpack.c.l.b16 %v819
    %v1002 = vunpack.c.h.b16 %v819
    %v1003 = vunpack.c.l.b16 %v820
    %v1004 = vunpack.c.l.b16 %v821
    %v1005 = vunpack.c.h.b16 %v821
    %v1006 = vunpack.c.l.b16 %v822
    %v1007 = vunpack.c.h.b16 %v822
    %v1008 = vunpack.c.l.b16 %v823
    %v1009 = vunpack.c.h.b16 %v823
    %v1010 = vunpack.c.l.b16 %v824
    %v1011 = vunpack.c.l.b16 %v825
    %v1012 = vunpack.c.h.b16 %v825
    %v1013 = vunpack.c.l.b16 %v826
    %v1014 = vunpack.c.h.b16 %v826
    %v1015 = vunpack.c.l.b16 %v827
    %v1016 = vunpack.c.h.b16 %v827
    %v1017 = vunpack.c.l.b16 %v828
    %v1018 = vunpack.c.l.b16 %v829
    %v1019 = vunpack.c.h.b16 %v829
    %v1020 = vunpack.c.l.b16 %v830
    %v1021 = vunpack.c.h.b16 %v830
    %v1022 = vunpack.c.l.b16 %v831
    %v1023 = vunpack.c.h.b16 %v831
    %v1024 = vunpack.c.l.b16 %v832
    %v1025 = vpack.c.b16 %v920, %v913
    %v1026 = vpack.c.b16 %v921, %v914
    %v1027 = vpack.c.b16 %v922, %v915
    %v1028 = vpack.c.b16 %v923, %v916
    %v1029 = vpack.c.b16 %v924, %v917
    %v1030 = vpack.c.b16 %v925, %v918
    %v1031 = vpack.c.b16 %v926, %v919
    %v1032 = vpack.c.b16 %v934, %v927
    %v1033 = vpack.c.b16 %v935, %v928
    %v1034 = vpack.c.b16 %v936, %v929
    %v1035 = vpack.c.b16 %v937, %v930
    %v1036 = vpack.c.b16 %v938, %v931
    %v1037 = vpack.c.b16 %v939, %v932
    %v1038 = vpack.c.b16 %v940, %v933
    %v1039 = vpack.c.b16 %v948, %v941
    %v1040 = vpack.c.b16 %v949, %v942
    %v1041 = vpack.c.b16 %v950, %v943
    %v1042 = vpack.c.b16 %v951, %v944
    %v1043 = vpack.c.b16 %v952, %v945
    %v1044 = vpack.c.b16 %v953, %v946
    %v1045 = vpack.c.b16 %v954, %v947
    %v1046 = vpack.c.b16 %v962, %v955
    %v1047 = vpack.c.b16 %v963, %v956
    %v1048 = vpack.c.b16 %v964, %v957
    %v1049 = vpack.c.b16 %v965, %v958
    %v1050 = vpack.c.b16 %v966, %v959
    %v1051 = vpack.c.b16 %v967, %v960
    %v1052 = vpack.c.b16 %v968, %v961
    %v1053 = vpack.c.b16 %v976, %v969
    %v1054 = vpack.c.b16 %v977, %v970
    %v1055 = vpack.c.b16 %v978, %v971
    %v1056 = vpack.c.b16 %v979, %v972
    %v1057 = vpack.c.b16 %v980, %v973
    %v1058 = vpack.c.b16 %v981, %v974
    %v1059 = vpack.c.b16 %v982, %v975
    %v1060 = vpack.c.b16 %v990, %v983
    %v1061 = vpack.c.b16 %v991, %v984
    %v1062 = vpack.c.b16 %v992, %v985
    %v1063 = vpack.c.b16 %v993, %v986
    %v1064 = vpack.c.b16 %v994, %v987
    %v1065 = vpack.c.b16 %v995, %v988
    %v1066 = vpack.c.b16 %v996, %v989
    %v1067 = vpack.c.b16 %v1004, %v997
    %v1068 = vpack.c.b16 %v1005, %v998
    %v1069 = vpack.c.b16 %v1006, %v999
    %v1070 = vpack.c.b16 %v1007, %v1000
    %v1071 = vpack.c.b16 %v1008, %v1001
    %v1072 = vpack.c.b16 %v1009, %v1002
    %v1073 = vpack.c.b16 %v1010, %v1003
    %v1074 = vpack.c.b16 %v1018, %v1011
    %v1075 = vpack.c.b16 %v1019, %v1012
    %v1076 = vpack.c.b16 %v1020, %v1013
    %v1077 = vpack.c.b16 %v1021, %v1014
    %v1078 = vpack.c.b16 %v1022, %v1015
    %v1079 = vpack.c.b16 %v1023, %v1016
    %v1080 = vpack.c.b16 %v1024, %v1017
    %1137 = vmatpush.bf16.msra.mxu0 %v1074
    %1138 = vmatpush.bf16.msra.mxu0 %v1067
    %1139 = vmatpush.bf16.msra.mxu0 %v1060
    %1140 = vmatpush.bf16.msra.mxu0 %v1053
    %1141 = vmatpush.bf16.msra.mxu0 %v1046
    %1142 = vmatpush.bf16.msra.mxu0 %v1039
    %1143 = vmatpush.bf16.msra.mxu0 %v1032
    %1144 = vmatpush.bf16.msra.mxu0 %v1025
    %1145 = vmatmul.bf16.gmra.mxu0 %v765
    %v1146 = vpop.f32.mrf.mxu0
    %v1147 = vadd.f32 %v835, %v1146
    %v1148 = vpop.f32.mrf.mxu0
    %v1149 = vadd.f32 %v835, %v1148
    %1150 = vmatmul.bf16.gmra.mxu0 %v766
    %v1151 = vpop.f32.mrf.mxu0
    %v1152 = vadd.f32 %v835, %v1151
    %v1153 = vpop.f32.mrf.mxu0
    %v1154 = vadd.f32 %v835, %v1153
    %1155 = vmatmul.bf16.gmra.mxu0 %v767
    %v1156 = vpop.f32.mrf.mxu0
    %v1157 = vadd.f32 %v835, %v1156
    %v1158 = vpop.f32.mrf.mxu0
    %v1159 = vadd.f32 %v835, %v1158
    %1160 = vmatmul.bf16.gmra.mxu0 %v768
    %v1161 = vpop.f32.mrf.mxu0
    %v1162 = vadd.f32 %v835, %v1161
    %v1163 = vpop.f32.mrf.mxu0
    %v1164 = vadd.f32 %v835, %v1163
    %1165 = vdwg.mxu0
    %1166 = vmatpush.bf16.msra.mxu0 %v1075
    %1167 = vmatpush.bf16.msra.mxu0 %v1068
    %1168 = vmatpush.bf16.msra.mxu0 %v1061
    %1169 = vmatpush.bf16.msra.mxu0 %v1054
    %1170 = vmatpush.bf16.msra.mxu0 %v1047
    %1171 = vmatpush.bf16.msra.mxu0 %v1040
    %1172 = vmatpush.bf16.msra.mxu0 %v1033
    %1173 = vmatpush.bf16.msra.mxu0 %v1026
    %1174 = vmatmul.bf16.gmra.mxu0 %v765
    %v1175 = vpop.f32.mrf.mxu0
    %v1176 = vadd.f32 %v836, %v1175
    %v1177 = vpop.f32.mrf.mxu0
    %v1178 = vadd.f32 %v836, %v1177
    %1179 = vmatmul.bf16.gmra.mxu0 %v766
    %v1180 = vpop.f32.mrf.mxu0
    %v1181 = vadd.f32 %v836, %v1180
    %v1182 = vpop.f32.mrf.mxu0
    %v1183 = vadd.f32 %v836, %v1182
    %1184 = vmatmul.bf16.gmra.mxu0 %v767
    %v1185 = vpop.f32.mrf.mxu0
    %v1186 = vadd.f32 %v836, %v1185
    %v1187 = vpop.f32.mrf.mxu0
    %v1188 = vadd.f32 %v836, %v1187
    %1189 = vmatmul.bf16.gmra.mxu0 %v768
    %v1190 = vpop.f32.mrf.mxu0
    %v1191 = vadd.f32 %v836, %v1190
    %v1192 = vpop.f32.mrf.mxu0
    %v1193 = vadd.f32 %v836, %v1192
    %1194 = vdwg.mxu0
    %1195 = vmatpush.bf16.msra.mxu0 %v1076
    %1196 = vmatpush.bf16.msra.mxu0 %v1069
    %1197 = vmatpush.bf16.msra.mxu0 %v1062
    %1198 = vmatpush.bf16.msra.mxu0 %v1055
    %1199 = vmatpush.bf16.msra.mxu0 %v1048
    %1200 = vmatpush.bf16.msra.mxu0 %v1041
    %1201 = vmatpush.bf16.msra.mxu0 %v1034
    %1202 = vmatpush.bf16.msra.mxu0 %v1027
    %1203 = vmatmul.bf16.gmra.mxu0 %v765
    %v1204 = vpop.f32.mrf.mxu0
    %v1205 = vadd.f32 %v837, %v1204
    %v1206 = vpop.f32.mrf.mxu0
    %v1207 = vadd.f32 %v837, %v1206
    %1208 = vmatmul.bf16.gmra.mxu0 %v766
    %v1209 = vpop.f32.mrf.mxu0
    %v1210 = vadd.f32 %v837, %v1209
    %v1211 = vpop.f32.mrf.mxu0
    %v1212 = vadd.f32 %v837, %v1211
    %1213 = vmatmul.bf16.gmra.mxu0 %v767
    %v1214 = vpop.f32.mrf.mxu0
    %v1215 = vadd.f32 %v837, %v1214
    %v1216 = vpop.f32.mrf.mxu0
    %v1217 = vadd.f32 %v837, %v1216
    %1218 = vmatmul.bf16.gmra.mxu0 %v768
    %v1219 = vpop.f32.mrf.mxu0
    %v1220 = vadd.f32 %v837, %v1219
    %v1221 = vpop.f32.mrf.mxu0
    %v1222 = vadd.f32 %v837, %v1221
    %1223 = vdwg.mxu0
    %1224 = vmatpush.bf16.msra.mxu0 %v1077
    %1225 = vmatpush.bf16.msra.mxu0 %v1070
    %1226 = vmatpush.bf16.msra.mxu0 %v1063
    %1227 = vmatpush.bf16.msra.mxu0 %v1056
    %1228 = vmatpush.bf16.msra.mxu0 %v1049
    %1229 = vmatpush.bf16.msra.mxu0 %v1042
    %1230 = vmatpush.bf16.msra.mxu0 %v1035
    %1231 = vmatpush.bf16.msra.mxu0 %v1028
    %1232 = vmatmul.bf16.gmra.mxu0 %v765
    %v1233 = vpop.f32.mrf.mxu0
    %v1234 = vadd.f32 %v838, %v1233
    %v1235 = vpop.f32.mrf.mxu0
    %v1236 = vadd.f32 %v838, %v1235
    %1237 = vmatmul.bf16.gmra.mxu0 %v766
    %v1238 = vpop.f32.mrf.mxu0
    %v1239 = vadd.f32 %v838, %v1238
    %v1240 = vpop.f32.mrf.mxu0
    %v1241 = vadd.f32 %v838, %v1240
    %1242 = vmatmul.bf16.gmra.mxu0 %v767
    %v1243 = vpop.f32.mrf.mxu0
    %v1244 = vadd.f32 %v838, %v1243
    %v1245 = vpop.f32.mrf.mxu0
    %v1246 = vadd.f32 %v838, %v1245
    %1247 = vmatmul.bf16.gmra.mxu0 %v768
    %v1248 = vpop.f32.mrf.mxu0
    %v1249 = vadd.f32 %v838, %v1248
    %v1250 = vpop.f32.mrf.mxu0
    %v1251 = vadd.f32 %v838, %v1250
    %1252 = vdwg.mxu0
    %1253 = vmatpush.bf16.msra.mxu0 %v1078
    %1254 = vmatpush.bf16.msra.mxu0 %v1071
    %1255 = vmatpush.bf16.msra.mxu0 %v1064
    %1256 = vmatpush.bf16.msra.mxu0 %v1057
    %1257 = vmatpush.bf16.msra.mxu0 %v1050
    %1258 = vmatpush.bf16.msra.mxu0 %v1043
    %1259 = vmatpush.bf16.msra.mxu0 %v1036
    %1260 = vmatpush.bf16.msra.mxu0 %v1029
    %1261 = vmatmul.bf16.gmra.mxu0 %v765
    %v1262 = vpop.f32.mrf.mxu0
    %v1263 = vadd.f32 %v839, %v1262
    %v1264 = vpop.f32.mrf.mxu0
    %v1265 = vadd.f32 %v839, %v1264
    %1266 = vmatmul.bf16.gmra.mxu0 %v766
    %v1267 = vpop.f32.mrf.mxu0
    %v1268 = vadd.f32 %v839, %v1267
    %v1269 = vpop.f32.mrf.mxu0
    %v1270 = vadd.f32 %v839, %v1269
    %1271 = vmatmul.bf16.gmra.mxu0 %v767
    %v1272 = vpop.f32.mrf.mxu0
    %v1273 = vadd.f32 %v839, %v1272
    %v1274 = vpop.f32.mrf.mxu0
    %v1275 = vadd.f32 %v839, %v1274
    %1276 = vmatmul.bf16.gmra.mxu0 %v768
    %v1277 = vpop.f32.mrf.mxu0
    %v1278 = vadd.f32 %v839, %v1277
    %v1279 = vpop.f32.mrf.mxu0
    %v1280 = vadd.f32 %v839, %v1279
    %1281 = vdwg.mxu0
    %1282 = vmatpush.bf16.msra.mxu0 %v1079
    %1283 = vmatpush.bf16.msra.mxu0 %v1072
    %1284 = vmatpush.bf16.msra.mxu0 %v1065
    %1285 = vmatpush.bf16.msra.mxu0 %v1058
    %1286 = vmatpush.bf16.msra.mxu0 %v1051
    %1287 = vmatpush.bf16.msra.mxu0 %v1044
    %1288 = vmatpush.bf16.msra.mxu0 %v1037
    %1289 = vmatpush.bf16.msra.mxu0 %v1030
    %1290 = vmatmul.bf16.gmra.mxu0 %v765
    %v1291 = vpop.f32.mrf.mxu0
    %v1292 = vadd.f32 %v840, %v1291
    %v1293 = vpop.f32.mrf.mxu0
    %v1294 = vadd.f32 %v840, %v1293
    %1295 = vmatmul.bf16.gmra.mxu0 %v766
    %v1296 = vpop.f32.mrf.mxu0
    %v1297 = vadd.f32 %v840, %v1296
    %v1298 = vpop.f32.mrf.mxu0
    %v1299 = vadd.f32 %v840, %v1298
    %1300 = vmatmul.bf16.gmra.mxu0 %v767
    %v1301 = vpop.f32.mrf.mxu0
    %v1302 = vadd.f32 %v840, %v1301
    %v1303 = vpop.f32.mrf.mxu0
    %v1304 = vadd.f32 %v840, %v1303
    %1305 = vmatmul.bf16.gmra.mxu0 %v768
    %v1306 = vpop.f32.mrf.mxu0
    %v1307 = vadd.f32 %v840, %v1306
    %v1308 = vpop.f32.mrf.mxu0
    %v1309 = vadd.f32 %v840, %v1308
    %1310 = vdwg.mxu0
    %1311 = vmatpush.bf16.msra.mxu0 %v1080
    %1312 = vmatpush.bf16.msra.mxu0 %v1073
    %1313 = vmatpush.bf16.msra.mxu0 %v1066
    %1314 = vmatpush.bf16.msra.mxu0 %v1059
    %1315 = vmatpush.bf16.msra.mxu0 %v1052
    %1316 = vmatpush.bf16.msra.mxu0 %v1045
    %1317 = vmatpush.bf16.msra.mxu0 %v1038
    %1318 = vmatpush.bf16.msra.mxu0 %v1031
    %1319 = vmatmul.bf16.gmra.mxu0 %v765
    %v1320 = vpop.f32.mrf.mxu0
    %v1321 = vadd.f32 %v841, %v1320
    %v1322 = vpop.f32.mrf.mxu0
    %v1323 = vadd.f32 %v841, %v1322
    %1324 = vmatmul.bf16.gmra.mxu0 %v766
    %v1325 = vpop.f32.mrf.mxu0
    %v1326 = vadd.f32 %v841, %v1325
    %v1327 = vpop.f32.mrf.mxu0
    %v1328 = vadd.f32 %v841, %v1327
    %1329 = vmatmul.bf16.gmra.mxu0 %v767
    %v1330 = vpop.f32.mrf.mxu0
    %v1331 = vadd.f32 %v841, %v1330
    %v1332 = vpop.f32.mrf.mxu0
    %v1333 = vadd.f32 %v841, %v1332
    %1334 = vmatmul.bf16.gmra.mxu0 %v768
    %v1335 = vpop.f32.mrf.mxu0
    %v1336 = vadd.f32 %v841, %v1335
    %v1337 = vpop.f32.mrf.mxu0
    %v1338 = vadd.f32 %v841, %v1337
    %1339 = vdwg.mxu0
    %v1340 = vsub.f32 0.0, %v1147
    %v1341 = vsub.f32 0.0, %v1176
    %v1342 = vsub.f32 0.0, %v1205
    %v1343 = vsub.f32 0.0, %v1234
    %v1344 = vsub.f32 0.0, %v1263
    %v1345 = vsub.f32 0.0, %v1292
    %v1346 = vsub.f32 0.0, %v1321
    %v1347 = vsub.f32 0.0, %v1149
    %v1348 = vsub.f32 0.0, %v1178
    %v1349 = vsub.f32 0.0, %v1207
    %v1350 = vsub.f32 0.0, %v1236
    %v1351 = vsub.f32 0.0, %v1265
    %v1352 = vsub.f32 0.0, %v1294
    %v1353 = vsub.f32 0.0, %v1323
    %v1354 = vsub.f32 0.0, %v1152
    %v1355 = vsub.f32 0.0, %v1181
    %v1356 = vsub.f32 0.0, %v1210
    %v1357 = vsub.f32 0.0, %v1239
    %v1358 = vsub.f32 0.0, %v1268
    %v1359 = vsub.f32 0.0, %v1297
    %v1360 = vsub.f32 0.0, %v1326
    %v1361 = vsub.f32 0.0, %v1154
    %v1362 = vsub.f32 0.0, %v1183
    %v1363 = vsub.f32 0.0, %v1212
    %v1364 = vsub.f32 0.0, %v1241
    %v1365 = vsub.f32 0.0, %v1270
    %v1366 = vsub.f32 0.0, %v1299
    %v1367 = vsub.f32 0.0, %v1328
    %v1368 = vsub.f32 0.0, %v1157
    %v1369 = vsub.f32 0.0, %v1186
    %v1370 = vsub.f32 0.0, %v1215
    %v1371 = vsub.f32 0.0, %v1244
    %v1372 = vsub.f32 0.0, %v1273
    %v1373 = vsub.f32 0.0, %v1302
    %v1374 = vsub.f32 0.0, %v1331
    %v1375 = vsub.f32 0.0, %v1159
    %v1376 = vsub.f32 0.0, %v1188
    %v1377 = vsub.f32 0.0, %v1217
    %v1378 = vsub.f32 0.0, %v1246
    %v1379 = vsub.f32 0.0, %v1275
    %v1380 = vsub.f32 0.0, %v1304
    %v1381 = vsub.f32 0.0, %v1333
    %v1382 = vsub.f32 0.0, %v1162
    %v1383 = vsub.f32 0.0, %v1191
    %v1384 = vsub.f32 0.0, %v1220
    %v1385 = vsub.f32 0.0, %v1249
    %v1386 = vsub.f32 0.0, %v1278
    %v1387 = vsub.f32 0.0, %v1307
    %v1388 = vsub.f32 0.0, %v1336
    %v1389 = vsub.f32 0.0, %v1164
    %v1390 = vsub.f32 0.0, %v1193
    %v1391 = vsub.f32 0.0, %v1222
    %v1392 = vsub.f32 0.0, %v1251
    %v1393 = vsub.f32 0.0, %v1280
    %v1394 = vsub.f32 0.0, %v1309
    %v1395 = vsub.f32 0.0, %v1338
    %v1396 = vmul.f32 %v1340, 1.442695
    %v1397 = vpow.pop %v1396
    %v1398 = vmul.f32 %v1341, 1.442695
    %v1399 = vpow.pop %v1398
    %v1400 = vmul.f32 %v1342, 1.442695
    %v1401 = vpow.pop %v1400
    %v1402 = vmul.f32 %v1343, 1.442695
    %v1403 = vpow.pop %v1402
    %v1404 = vmul.f32 %v1344, 1.442695
    %v1405 = vpow.pop %v1404
    %v1406 = vmul.f32 %v1345, 1.442695
    %v1407 = vpow.pop %v1406
    %v1408 = vmul.f32 %v1346, 1.442695
    %v1409 = vpow.pop %v1408
    %v1410 = vmul.f32 %v1347, 1.442695
    %v1411 = vpow.pop %v1410
    %v1412 = vmul.f32 %v1348, 1.442695
    %v1413 = vpow.pop %v1412
    %v1414 = vmul.f32 %v1349, 1.442695
    %v1415 = vpow.pop %v1414
    %v1416 = vmul.f32 %v1350, 1.442695
    %v1417 = vpow.pop %v1416
    %v1418 = vmul.f32 %v1351, 1.442695
    %v1419 = vpow.pop %v1418
    %v1420 = vmul.f32 %v1352, 1.442695
    %v1421 = vpow.pop %v1420
    %v1422 = vmul.f32 %v1353, 1.442695
    %v1423 = vpow.pop %v1422
    %v1424 = vmul.f32 %v1354, 1.442695
    %v1425 = vpow.pop %v1424
    %v1426 = vmul.f32 %v1355, 1.442695
    %v1427 = vpow.pop %v1426
    %v1428 = vmul.f32 %v1356, 1.442695
    %v1429 = vpow.pop %v1428
    %v1430 = vmul.f32 %v1357, 1.442695
    %v1431 = vpow.pop %v1430
    %v1432 = vmul.f32 %v1358, 1.442695
    %v1433 = vpow.pop %v1432
    %v1434 = vmul.f32 %v1359, 1.442695
    %v1435 = vpow.pop %v1434
    %v1436 = vmul.f32 %v1360, 1.442695
    %v1437 = vpow.pop %v1436
    %v1438 = vmul.f32 %v1361, 1.442695
    %v1439 = vpow.pop %v1438
    %v1440 = vmul.f32 %v1362, 1.442695
    %v1441 = vpow.pop %v1440
    %v1442 = vmul.f32 %v1363, 1.442695
    %v1443 = vpow.pop %v1442
    %v1444 = vmul.f32 %v1364, 1.442695
    %v1445 = vpow.pop %v1444
    %v1446 = vmul.f32 %v1365, 1.442695
    %v1447 = vpow.pop %v1446
    %v1448 = vmul.f32 %v1366, 1.442695
    %v1449 = vpow.pop %v1448
    %v1450 = vmul.f32 %v1367, 1.442695
    %v1451 = vpow.pop %v1450
    %v1452 = vmul.f32 %v1368, 1.442695
    %v1453 = vpow.pop %v1452
    %v1454 = vmul.f32 %v1369, 1.442695
    %v1455 = vpow.pop %v1454
    %v1456 = vmul.f32 %v1370, 1.442695
    %v1457 = vpow.pop %v1456
    %v1458 = vmul.f32 %v1371, 1.442695
    %v1459 = vpow.pop %v1458
    %v1460 = vmul.f32 %v1372, 1.442695
    %v1461 = vpow.pop %v1460
    %v1462 = vmul.f32 %v1373, 1.442695
    %v1463 = vpow.pop %v1462
    %v1464 = vmul.f32 %v1374, 1.442695
    %v1465 = vpow.pop %v1464
    %v1466 = vmul.f32 %v1375, 1.442695
    %v1467 = vpow.pop %v1466
    %v1468 = vmul.f32 %v1376, 1.442695
    %v1469 = vpow.pop %v1468
    %v1470 = vmul.f32 %v1377, 1.442695
    %v1471 = vpow.pop %v1470
    %v1472 = vmul.f32 %v1378, 1.442695
    %v1473 = vpow.pop %v1472
    %v1474 = vmul.f32 %v1379, 1.442695
    %v1475 = vpow.pop %v1474
    %v1476 = vmul.f32 %v1380, 1.442695
    %v1477 = vpow.pop %v1476
    %v1478 = vmul.f32 %v1381, 1.442695
    %v1479 = vpow.pop %v1478
    %v1480 = vmul.f32 %v1382, 1.442695
    %v1481 = vpow.pop %v1480
    %v1482 = vmul.f32 %v1383, 1.442695
    %v1483 = vpow.pop %v1482
    %v1484 = vmul.f32 %v1384, 1.442695
    %v1485 = vpow.pop %v1484
    %v1486 = vmul.f32 %v1385, 1.442695
    %v1487 = vpow.pop %v1486
    %v1488 = vmul.f32 %v1386, 1.442695
    %v1489 = vpow.pop %v1488
    %v1490 = vmul.f32 %v1387, 1.442695
    %v1491 = vpow.pop %v1490
    %v1492 = vmul.f32 %v1388, 1.442695
    %v1493 = vpow.pop %v1492
    %v1494 = vmul.f32 %v1389, 1.442695
    %v1495 = vpow.pop %v1494
    %v1496 = vmul.f32 %v1390, 1.442695
    %v1497 = vpow.pop %v1496
    %v1498 = vmul.f32 %v1391, 1.442695
    %v1499 = vpow.pop %v1498
    %v1500 = vmul.f32 %v1392, 1.442695
    %v1501 = vpow.pop %v1500
    %v1502 = vmul.f32 %v1393, 1.442695
    %v1503 = vpow.pop %v1502
    %v1504 = vmul.f32 %v1394, 1.442695
    %v1505 = vpow.pop %v1504
    %v1506 = vmul.f32 %v1395, 1.442695
    %v1507 = vpow.pop %v1506
    %v1508 = vadd.f32 %v1397, 1.0
    %v1509 = vadd.f32 %v1399, 1.0
    %v1510 = vadd.f32 %v1401, 1.0
    %v1511 = vadd.f32 %v1403, 1.0
    %v1512 = vadd.f32 %v1405, 1.0
    %v1513 = vadd.f32 %v1407, 1.0
    %v1514 = vadd.f32 %v1409, 1.0
    %v1515 = vadd.f32 %v1411, 1.0
    %v1516 = vadd.f32 %v1413, 1.0
    %v1517 = vadd.f32 %v1415, 1.0
    %v1518 = vadd.f32 %v1417, 1.0
    %v1519 = vadd.f32 %v1419, 1.0
    %v1520 = vadd.f32 %v1421, 1.0
    %v1521 = vadd.f32 %v1423, 1.0
    %v1522 = vadd.f32 %v1425, 1.0
    %v1523 = vadd.f32 %v1427, 1.0
    %v1524 = vadd.f32 %v1429, 1.0
    %v1525 = vadd.f32 %v1431, 1.0
    %v1526 = vadd.f32 %v1433, 1.0
    %v1527 = vadd.f32 %v1435, 1.0
    %v1528 = vadd.f32 %v1437, 1.0
    %v1529 = vadd.f32 %v1439, 1.0
    %v1530 = vadd.f32 %v1441, 1.0
    %v1531 = vadd.f32 %v1443, 1.0
    %v1532 = vadd.f32 %v1445, 1.0
    %v1533 = vadd.f32 %v1447, 1.0
    %v1534 = vadd.f32 %v1449, 1.0
    %v1535 = vadd.f32 %v1451, 1.0
    %v1536 = vadd.f32 %v1453, 1.0
    %v1537 = vadd.f32 %v1455, 1.0
    %v1538 = vadd.f32 %v1457, 1.0
    %v1539 = vadd.f32 %v1459, 1.0
    %v1540 = vadd.f32 %v1461, 1.0
    %v1541 = vadd.f32 %v1463, 1.0
    %v1542 = vadd.f32 %v1465, 1.0
    %v1543 = vadd.f32 %v1467, 1.0
    %v1544 = vadd.f32 %v1469, 1.0
    %v1545 = vadd.f32 %v1471, 1.0
    %v1546 = vadd.f32 %v1473, 1.0
    %v1547 = vadd.f32 %v1475, 1.0
    %v1548 = vadd.f32 %v1477, 1.0
    %v1549 = vadd.f32 %v1479, 1.0
    %v1550 = vadd.f32 %v1481, 1.0
    %v1551 = vadd.f32 %v1483, 1.0
    %v1552 = vadd.f32 %v1485, 1.0
    %v1553 = vadd.f32 %v1487, 1.0
    %v1554 = vadd.f32 %v1489, 1.0
    %v1555 = vadd.f32 %v1491, 1.0
    %v1556 = vadd.f32 %v1493, 1.0
    %v1557 = vadd.f32 %v1495, 1.0
    %v1558 = vadd.f32 %v1497, 1.0
    %v1559 = vadd.f32 %v1499, 1.0
    %v1560 = vadd.f32 %v1501, 1.0
    %v1561 = vadd.f32 %v1503, 1.0
    %v1562 = vadd.f32 %v1505, 1.0
    %v1563 = vadd.f32 %v1507, 1.0
    %v1564 = vrcp.pop %v1508
    %v1565 = vrcp.pop %v1509
    %v1566 = vrcp.pop %v1510
    %v1567 = vrcp.pop %v1511
    %v1568 = vrcp.pop %v1512
    %v1569 = vrcp.pop %v1513
    %v1570 = vrcp.pop %v1514
    %v1571 = vrcp.pop %v1515
    %v1572 = vrcp.pop %v1516
    %v1573 = vrcp.pop %v1517
    %v1574 = vrcp.pop %v1518
    %v1575 = vrcp.pop %v1519
    %v1576 = vrcp.pop %v1520
    %v1577 = vrcp.pop %v1521
    %v1578 = vrcp.pop %v1522
    %v1579 = vrcp.pop %v1523
    %v1580 = vrcp.pop %v1524
    %v1581 = vrcp.pop %v1525
    %v1582 = vrcp.pop %v1526
    %v1583 = vrcp.pop %v1527
    %v1584 = vrcp.pop %v1528
    %v1585 = vrcp.pop %v1529
    %v1586 = vrcp.pop %v1530
    %v1587 = vrcp.pop %v1531
    %v1588 = vrcp.pop %v1532
    %v1589 = vrcp.pop %v1533
    %v1590 = vrcp.pop %v1534
    %v1591 = vrcp.pop %v1535
    %v1592 = vrcp.pop %v1536
    %v1593 = vrcp.pop %v1537
    %v1594 = vrcp.pop %v1538
    %v1595 = vrcp.pop %v1539
    %v1596 = vrcp.pop %v1540
    %v1597 = vrcp.pop %v1541
    %v1598 = vrcp.pop %v1542
    %v1599 = vrcp.pop %v1543
    %v1600 = vrcp.pop %v1544
    %v1601 = vrcp.pop %v1545
    %v1602 = vrcp.pop %v1546
    %v1603 = vrcp.pop %v1547
    %v1604 = vrcp.pop %v1548
    %v1605 = vrcp.pop %v1549
    %v1606 = vrcp.pop %v1550
    %v1607 = vrcp.pop %v1551
    %v1608 = vrcp.pop %v1552
    %v1609 = vrcp.pop %v1553
    %v1610 = vrcp.pop %v1554
    %v1611 = vrcp.pop %v1555
    %v1612 = vrcp.pop %v1556
    %v1613 = vrcp.pop %v1557
    %v1614 = vrcp.pop %v1558
    %v1615 = vrcp.pop %v1559
    %v1616 = vrcp.pop %v1560
    %v1617 = vrcp.pop %v1561
    %v1618 = vrcp.pop %v1562
    %v1619 = vrcp.pop %v1563
    %1620 = vst [vmem:[#allocation7] sm:$0xff] %v1564
    %1621 = vst [vmem:[#allocation7 + $0x8] sm:$0xff] %v1565
    %1622 = vst [vmem:[#allocation7 + $0x10] sm:$0xff] %v1566
    %1623 = vst [vmem:[#allocation7 + $0x18] sm:$0xff] %v1567
    %1624 = vst [vmem:[#allocation7 + $0x20] sm:$0xff] %v1568
    %1625 = vst [vmem:[#allocation7 + $0x28] sm:$0xff] %v1569
    %1626 = vst.msk [vmem:[#allocation7 + $0x30] sm:$0xff] %vm532, %v1570
    %1627 = vst [vmem:[#allocation7 + $0x38] sm:$0xff] %v1571
    %1628 = vst [vmem:[#allocation7 + $0x40] sm:$0xff] %v1572
    %1629 = vst [vmem:[#allocation7 + $0x48] sm:$0xff] %v1573
    %1630 = vst [vmem:[#allocation7 + $0x50] sm:$0xff] %v1574
    %1631 = vst [vmem:[#allocation7 + $0x58] sm:$0xff] %v1575
    %1632 = vst [vmem:[#allocation7 + $0x60] sm:$0xff] %v1576
    %1633 = vst.msk [vmem:[#allocation7 + $0x68] sm:$0xff] %vm532, %v1577
    %1634 = vst [vmem:[#allocation7 + $0x70] sm:$0xff] %v1578
    %1635 = vst [vmem:[#allocation7 + $0x78] sm:$0xff] %v1579
    %1636 = vst [vmem:[#allocation7 + $0x80] sm:$0xff] %v1580
    %1637 = vst [vmem:[#allocation7 + $0x88] sm:$0xff] %v1581
    %1638 = vst [vmem:[#allocation7 + $0x90] sm:$0xff] %v1582
    %1639 = vst [vmem:[#allocation7 + $0x98] sm:$0xff] %v1583
    %1640 = vst.msk [vmem:[#allocation7 + $0xa0] sm:$0xff] %vm532, %v1584
    %1641 = vst [vmem:[#allocation7 + $0xa8] sm:$0xff] %v1585
    %1642 = vst [vmem:[#allocation7 + $0xb0] sm:$0xff] %v1586
    %1643 = vst [vmem:[#allocation7 + $0xb8] sm:$0xff] %v1587
    %1644 = vst [vmem:[#allocation7 + $0xc0] sm:$0xff] %v1588
    %1645 = vst [vmem:[#allocation7 + $0xc8] sm:$0xff] %v1589
    %1646 = vst [vmem:[#allocation7 + $0xd0] sm:$0xff] %v1590
    %1647 = vst.msk [vmem:[#allocation7 + $0xd8] sm:$0xff] %vm532, %v1591
    %1648 = vst [vmem:[#allocation7 + $0xe0] sm:$0xff] %v1592
    %1649 = vst [vmem:[#allocation7 + $0xe8] sm:$0xff] %v1593
    %1650 = vst [vmem:[#allocation7 + $0xf0] sm:$0xff] %v1594
    %1651 = vst [vmem:[#allocation7 + $0xf8] sm:$0xff] %v1595
    %1652 = vst [vmem:[#allocation7 + $0x100] sm:$0xff] %v1596
    %1653 = vst [vmem:[#allocation7 + $0x108] sm:$0xff] %v1597
    %1654 = vst.msk [vmem:[#allocation7 + $0x110] sm:$0xff] %vm532, %v1598
    %1655 = vst [vmem:[#allocation7 + $0x118] sm:$0xff] %v1599
    %1656 = vst [vmem:[#allocation7 + $0x120] sm:$0xff] %v1600
    %1657 = vst [vmem:[#allocation7 + $0x128] sm:$0xff] %v1601
    %1658 = vst [vmem:[#allocation7 + $0x130] sm:$0xff] %v1602
    %1659 = vst [vmem:[#allocation7 + $0x138] sm:$0xff] %v1603
    %1660 = vst [vmem:[#allocation7 + $0x140] sm:$0xff] %v1604
    %1661 = vst.msk [vmem:[#allocation7 + $0x148] sm:$0xff] %vm532, %v1605
    %1662 = vst [vmem:[#allocation7 + $0x150] sm:$0xff] %v1606
    %1663 = vst [vmem:[#allocation7 + $0x158] sm:$0xff] %v1607
    %1664 = vst [vmem:[#allocation7 + $0x160] sm:$0xff] %v1608
    %1665 = vst [vmem:[#allocation7 + $0x168] sm:$0xff] %v1609
    %1666 = vst [vmem:[#allocation7 + $0x170] sm:$0xff] %v1610
    %1667 = vst [vmem:[#allocation7 + $0x178] sm:$0xff] %v1611
    %1668 = vst.msk [vmem:[#allocation7 + $0x180] sm:$0xff] %vm532, %v1612
    %1669 = vst [vmem:[#allocation7 + $0x188] sm:$0xff] %v1613
    %1670 = vst [vmem:[#allocation7 + $0x190] sm:$0xff] %v1614
    %1671 = vst [vmem:[#allocation7 + $0x198] sm:$0xff] %v1615
    %1672 = vst [vmem:[#allocation7 + $0x1a0] sm:$0xff] %v1616
    %1673 = vst [vmem:[#allocation7 + $0x1a8] sm:$0xff] %v1617
    %1674 = vst [vmem:[#allocation7 + $0x1b0] sm:$0xff] %v1618
    %1675 = vst.msk [vmem:[#allocation7 + $0x1b8] sm:$0xff] %vm532, %v1619
    // Predicated region
    $region30: #{autoencoder_forward.1} parent=1 // pred_check
      _
    $region31: #{autoencoder_forward.1} parent=1 // pred_check_branch
      %1677 = sbr.rel (0) target = $region33
    $region32: #{autoencoder_forward.1} parent=1 // pred_region
      _
    $region33: #{autoencoder_forward.1} parent=1 // pred_fallthru
      _
    // Predicated region
    $region34: #{autoencoder_forward.1} parent=1 // pred_check
      _
    $region35: #{autoencoder_forward.1} parent=1 // pred_check_branch
      %1679 = sbr.rel (0) target = $region37
    $region36: #{autoencoder_forward.1} parent=1 // pred_region
      %1681 = vsyncadd [#allocation4], 0
      %s1682 = sshll.u32 [#allocation7], 4
      %s1683 = int_to_ptr.vmem [resolvable:$true] %s1682
      %s1684 = sshll.u32 %s6, 4
      %s1685 = int_to_ptr.hbm [resolvable:$true] %s1684
      %1690 = dma.vmem_to_hbm [thread:$0]  %s1683, 7168, %s1685, [#allocation4], 896, 896, 56
    $region37: #{autoencoder_forward.1} parent=1 // pred_fallthru
      _
    // Predicated region
    $region38: #{autoencoder_forward.1} parent=1 // pred_check
      _
    $region39: #{autoencoder_forward.1} parent=1 // pred_check_branch
      %1692 = sbr.rel (0) target = $region41
    $region40: #{autoencoder_forward.1} parent=1 // pred_region
      _
    $region41: #{autoencoder_forward.1} parent=1 // pred_fallthru
      _
    // Predicated region
    $region42: #{autoencoder_forward.1} parent=1 // pred_check
      _
    $region43: #{autoencoder_forward.1} parent=1 // pred_check_branch
      %1694 = sbr.rel (0) target = $region45
    $region44: #{autoencoder_forward.1} parent=1 // pred_region
      %1696 = dma.done [#allocation4], 7168
    $region45: #{autoencoder_forward.1} parent=1 // pred_fallthru
      _
    %1697 = vsyncpa [#allocation3], 1
    %1698 = vsyncpa [#allocation6], 1
    %1699 = vsyncpa [#allocation4], 1

</llo_original>
